<compile_context>
chip_gen: v7x
topology: tpu7x:2x2x1
jax: 0.10.0
libtpu: 0.0.40
codegen_flags: <defaults>
</compile_context>

<pallas_src>
import math

import jax
import jax.numpy as jnp
from jax import lax
from jax.experimental import pallas as pl
from jax.experimental.pallas import tpu as pltpu  # noqa: F401  (TPU backend assumed)

# ---------------- problem sizes (small, consistent with the module) ----------------
B = 2          # batch
T = 8          # sequence length (<= n_ctx = D)
D = 32         # dsize / n_embd (== n_ctx in Block.__init__)
H = 4          # n_head
DH = D // H    # per-head dim
BT = B * T
LOG_T = T.bit_length() - 1
assert (1 << LOG_T) == T, "T must be a power of two for the shift-based mask"
EPS = 1e-5
GELU_C = math.sqrt(2.0 / math.pi)


def _gelu(x):
    return 0.5 * x * (1.0 + jnp.tanh(GELU_C * (x + 0.044715 * x * x * x)))


def _layernorm(x, g, b):
    mu = jnp.mean(x, axis=-1, keepdims=True)
    var = jnp.mean((x - mu) ** 2, axis=-1, keepdims=True)
    return (x - mu) * lax.rsqrt(var + EPS) * g + b


# --------------------------------- Pallas kernel -----------------------------------
def block_kernel(x_ref, w_d_ref, w_mo_ref, vec_ref, out_ref):
    x = x_ref[...]                                             # (B*T, D)
    w_d = w_d_ref[...]                                         # (D, 8D) = [w_qkv|w_ao|w_fc]
    vec = vec_ref[...]                                         # (8, 128) packed gains/biases

    ln1_g = vec[0:1, 0:D]
    ln1_b = vec[0:1, D:2 * D]
    ln2_g = vec[0:1, 2 * D:3 * D]
    ln2_b = vec[0:1, 3 * D:4 * D]
    b_ao = vec[1:2, 0:D]
    b_mo = vec[1:2, D:2 * D]
    b_qkv = vec[2:3, 0:3 * D]
    b_fc = vec[3:4, 0:4 * D]

    # ---- ln_1 ----
    xn = _layernorm(x, ln1_g, ln1_b)

    # ---- c_attn: (B*T, D) @ (D, 3D) + b ----
    h = jnp.dot(xn, w_d[:, 0:3 * D],
                preferred_element_type=jnp.float32) + b_qkv    # (B*T, 3D)

    # present = [key | value]: stays at the SAME lane offsets (32:96) it has in h.
    # (PyTorch stacks key.transpose(-2,-1), i.e. the un-transposed (..., T, DH) layout —
    #  exactly what sits in h[:, D:3D].)  Lanes 96:128 are pad so the output stays a
    #  single lane-dense 128-wide slab with one writeback DMA.
    out_ref[:, D:3 * D] = h[:, D:3 * D]
    out_ref[:, 3 * D:4 * D] = jnp.zeros((BT, D), jnp.float32)

    # ---- head-batched attention ----
    # Assemble (H, B*T, DH) q/k/v once (static lane slices, stacked along a new batch dim).
    q3 = jnp.stack([h[:, hi * DH:(hi + 1) * DH] for hi in range(H)], axis=0)
    k3 = jnp.stack([h[:, D + hi * DH:D + (hi + 1) * DH] for hi in range(H)], axis=0)
    v3 = jnp.stack([h[:, 2 * D + hi * DH:2 * D + (hi + 1) * DH] for hi in range(H)], axis=0)

    # Combined same-batch AND causal mask over the flattened (B*T, B*T) score matrix,
    # built with shifts (T is a power of two) instead of div/mod.
    ri = lax.broadcasted_iota(jnp.int32, (BT, BT), 0)
    ci = lax.broadcasted_iota(jnp.int32, (BT, BT), 1)
    keep = jnp.logical_and((ri >> LOG_T) == (ci >> LOG_T), ci <= ri)

    # scores for all heads at once (scale=False in the module).
    s = jnp.einsum('hqd,hkd->hqk', q3, k3,
                   preferred_element_type=jnp.float32)         # (H, B*T, B*T)
    # w*b - 10000*(1-b) with b in {0,1}  ==  select(b, w, -10000)
    s = jnp.where(keep[None], s, -10000.0)
    s = s - jnp.max(s, axis=-1, keepdims=True)                 # kept for robustness
    e = jnp.exp(s)
    p = e * pl.reciprocal(jnp.sum(e, axis=-1, keepdims=True), approx=True)
    a3 = jnp.einsum('hqk,hkd->hqd', p, v3,
                    preferred_element_type=jnp.float32)        # (H, B*T, DH)

    # merge_heads + c_proj + residual
    a = jnp.concatenate([a3[hi] for hi in range(H)], axis=-1)  # (B*T, D)
    a = jnp.dot(a, w_d[:, 3 * D:4 * D],
                preferred_element_type=jnp.float32) + b_ao
    x1 = x + a

    # ---- ln_2 + MLP + residual ----
    xn2 = _layernorm(x1, ln2_g, ln2_b)
    hm = _gelu(jnp.dot(xn2, w_d[:, 4 * D:8 * D],
                       preferred_element_type=jnp.float32) + b_fc)
    m = jnp.dot(hm, w_mo_ref[...],
                preferred_element_type=jnp.float32) + b_mo

    out_ref[:, 0:D] = x1 + m


def block_forward(x, params):
    """x: (B, T, D) float32.  Returns (y, present) with
       y: (B, T, D), present: (2, B, H, T, DH)."""
    (ln1_g, ln1_b, w_qkv, b_qkv, w_ao, b_ao,
     ln2_g, ln2_b, w_fc, b_fc, w_mo, b_mo) = params

    x2d = x.reshape(BT, D)                                     # fold batch, free reshape

    # One lane-dense (D, 8D) weight slab: [w_qkv | w_attn_proj | w_fc].
    w_d = jnp.concatenate([w_qkv, w_ao, w_fc], axis=1)         # (32, 256)

    # All gains / biases packed into a single (8, 128) tile (exactly one f32 vreg).
    vec = jnp.zeros((8, 4 * D), jnp.float32)
    vec = vec.at[0, 0:D].set(ln1_g[0]).at[0, D:2 * D].set(ln1_b[0])
    vec = vec.at[0, 2 * D:3 * D].set(ln2_g[0]).at[0, 3 * D:4 * D].set(ln2_b[0])
    vec = vec.at[1, 0:D].set(b_ao[0]).at[1, D:2 * D].set(b_mo[0])
    vec = vec.at[2, 0:3 * D].set(b_qkv[0])
    vec = vec.at[3, 0:4 * D].set(b_fc[0])

    out = pl.pallas_call(
        block_kernel,
        out_shape=jax.ShapeDtypeStruct((BT, 4 * D), jnp.float32),   # [y | key | value | pad]
        # gridless: every operand is a whole-array VMEM block (~70 KB total)
    )(x2d, w_d, w_mo, vec)

    y = out[:, 0:D].reshape(B, T, D)
    # (B, T, 2, H, DH) -> (2, B, H, T, DH): pure layout plumbing outside the kernel.
    present = jnp.transpose(out[:, D:3 * D].reshape(B, T, 2, H, DH), (2, 0, 3, 1, 4))
    return y, present


# ------------------------------ pure-JAX reference ---------------------------------
def block_reference(x, params):
    (ln1_g, ln1_b, w_qkv, b_qkv, w_ao, b_ao,
     ln2_g, ln2_b, w_fc, b_fc, w_mo, b_mo) = params

    def ln(t, g, b):
        mu = jnp.mean(t, axis=-1, keepdims=True)
        var = jnp.mean((t - mu) ** 2, axis=-1, keepdims=True)
        return (t - mu) / jnp.sqrt(var + EPS) * g + b

    xn = ln(x, ln1_g, ln1_b)
    h = xn @ w_qkv + b_qkv
    q, k, v = h[..., :D], h[..., D:2 * D], h[..., 2 * D:]
    split = lambda t: jnp.transpose(t.reshape(B, T, H, DH), (0, 2, 1, 3))  # (B,H,T,DH)
    q, k, v = split(q), split(k), split(v)
    s = jnp.einsum('bhqd,bhkd->bhqk', q, k)                    # no 1/sqrt(DH): scale=False
    bmask = jnp.tril(jnp.ones((T, T), jnp.float32))[None, None]
    s = s * bmask - 10000.0 * (1.0 - bmask)
    p = jax.nn.softmax(s, axis=-1)
    a = jnp.einsum('bhqk,bhkd->bhqd', p, v)
    a = jnp.transpose(a, (0, 2, 1, 3)).reshape(B, T, D)
    a = a @ w_ao + b_ao
    x1 = x + a
    xn2 = ln(x1, ln2_g, ln2_b)
    m = _gelu(xn2 @ w_fc + b_fc) @ w_mo + b_mo
    present = jnp.stack((k, v), axis=0)                        # (2, B, H, T, DH)
    return x1 + m, present


# ------------------------------------ main ------------------------------------------
if __name__ == "__main__":
    key = jax.random.PRNGKey(0)
    keys = jax.random.split(key, 8)

    x = jax.random.normal(keys[0], (B, T, D), jnp.float32)

    params = (
        jnp.ones((1, D), jnp.float32),                                  # ln1 gamma
        jnp.zeros((1, D), jnp.float32),                                 # ln1 beta
        0.02 * jax.random.normal(keys[1], (D, 3 * D), jnp.float32),     # c_attn W
        jnp.zeros((1, 3 * D), jnp.float32),                             # c_attn b
        0.02 * jax.random.normal(keys[2], (D, D), jnp.float32),         # attn c_proj W
        jnp.zeros((1, D), jnp.float32),                                 # attn c_proj b
        jnp.ones((1, D), jnp.float32),                                  # ln2 gamma
        jnp.zeros((1, D), jnp.float32),                                 # ln2 beta
        0.02 * jax.random.normal(keys[3], (D, 4 * D), jnp.float32),     # mlp c_fc W
        jnp.zeros((1, 4 * D), jnp.float32),                             # mlp c_fc b
        0.02 * jax.random.normal(keys[4], (4 * D, D), jnp.float32),     # mlp c_proj W
        jnp.zeros((1, D), jnp.float32),                                 # mlp c_proj b
    )

    fwd = jax.jit(block_forward)
    y, present = jax.block_until_ready(fwd(x, params))
    y_ref, present_ref = block_reference(x, params)

    assert y.shape == (B, T, D)
    assert present.shape == (2, B, H, T, DH)
    # tolerance accounts for the EUP approximate reciprocal in the in-kernel softmax
    assert jnp.allclose(y, y_ref, atol=1e-3, rtol=1e-3), "output mismatch"
    assert jnp.allclose(present, present_ref, atol=1e-3, rtol=1e-3), "present mismatch"

    print("KERNEL_OK")
</pallas_src>

<mosaic_0001>
module attributes {stable_mosaic.version = 11 : i64} {
  func.func @block_kernel(%arg0: memref<16x32xf32, #tpu.memory_space<vmem>>, %arg1: memref<32x256xf32, #tpu.memory_space<vmem>>, %arg2: memref<128x32xf32, #tpu.memory_space<vmem>>, %arg3: memref<8x128xf32, #tpu.memory_space<vmem>>, %arg4: memref<16x128xf32, #tpu.memory_space<vmem>>) attributes {dimension_semantics = [], scalar_prefetch = 0 : i64, scratch_operands = 0 : i64, tpu.core_type = #tpu.core_type<tc>} {
    %c0 = arith.constant 0 : index
    %c0_0 = arith.constant 0 : index
    %0 = vector.load %arg0[%c0, %c0_0] : memref<16x32xf32, #tpu.memory_space<vmem>>, vector<16x32xf32>
    %c0_1 = arith.constant 0 : index
    %c0_2 = arith.constant 0 : index
    %1 = vector.load %arg1[%c0_1, %c0_2] : memref<32x256xf32, #tpu.memory_space<vmem>>, vector<32x256xf32>
    %c0_3 = arith.constant 0 : index
    %c0_4 = arith.constant 0 : index
    %2 = vector.load %arg3[%c0_3, %c0_4] : memref<8x128xf32, #tpu.memory_space<vmem>>, vector<8x128xf32>
    %3 = vector.extract_strided_slice %2 {offsets = [0, 0], sizes = [1, 32], strides = [1, 1]} : vector<8x128xf32> to vector<1x32xf32>
    %4 = vector.extract_strided_slice %2 {offsets = [0, 32], sizes = [1, 32], strides = [1, 1]} : vector<8x128xf32> to vector<1x32xf32>
    %5 = vector.extract_strided_slice %2 {offsets = [0, 64], sizes = [1, 32], strides = [1, 1]} : vector<8x128xf32> to vector<1x32xf32>
    %6 = vector.extract_strided_slice %2 {offsets = [0, 96], sizes = [1, 32], strides = [1, 1]} : vector<8x128xf32> to vector<1x32xf32>
    %7 = vector.extract_strided_slice %2 {offsets = [1, 0], sizes = [1, 32], strides = [1, 1]} : vector<8x128xf32> to vector<1x32xf32>
    %8 = vector.extract_strided_slice %2 {offsets = [1, 32], sizes = [1, 32], strides = [1, 1]} : vector<8x128xf32> to vector<1x32xf32>
    %9 = vector.extract_strided_slice %2 {offsets = [2, 0], sizes = [1, 96], strides = [1, 1]} : vector<8x128xf32> to vector<1x96xf32>
    %10 = vector.extract_strided_slice %2 {offsets = [3, 0], sizes = [1, 128], strides = [1, 1]} : vector<8x128xf32> to vector<1x128xf32>
    %cst = arith.constant dense<0.000000e+00> : vector<16xf32>
    %11 = vector.multi_reduction <add>, %0, %cst [1] : vector<16x32xf32> to vector<16xf32>
    %12 = vector.shape_cast %11 : vector<16xf32> to vector<16x1xf32>
    %cst_5 = arith.constant 3.200000e+01 : f32
    %13 = vector.broadcast %cst_5 : f32 to vector<16x1xf32>
    %14 = arith.divf %12, %13 : vector<16x1xf32>
    %15 = vector.broadcast %14 : vector<16x1xf32> to vector<16x32xf32>
    %16 = arith.subf %0, %15 : vector<16x32xf32>
    %17 = arith.mulf %16, %16 : vector<16x32xf32>
    %cst_6 = arith.constant dense<0.000000e+00> : vector<16xf32>
    %18 = vector.multi_reduction <add>, %17, %cst_6 [1] : vector<16x32xf32> to vector<16xf32>
    %19 = vector.shape_cast %18 : vector<16xf32> to vector<16x1xf32>
    %cst_7 = arith.constant 3.200000e+01 : f32
    %20 = vector.broadcast %cst_7 : f32 to vector<16x1xf32>
    %21 = arith.divf %19, %20 : vector<16x1xf32>
    %22 = vector.broadcast %14 : vector<16x1xf32> to vector<16x32xf32>
    %23 = arith.subf %0, %22 : vector<16x32xf32>
    %cst_8 = arith.constant 9.99999974E-6 : f32
    %24 = vector.broadcast %cst_8 : f32 to vector<16x1xf32>
    %25 = arith.addf %21, %24 : vector<16x1xf32>
    %26 = math.rsqrt %25 : vector<16x1xf32>
    %27 = vector.broadcast %26 : vector<16x1xf32> to vector<16x32xf32>
    %28 = arith.mulf %23, %27 : vector<16x32xf32>
    %29 = vector.broadcast %3 : vector<1x32xf32> to vector<16x32xf32>
    %30 = arith.mulf %28, %29 : vector<16x32xf32>
    %31 = vector.broadcast %4 : vector<1x32xf32> to vector<16x32xf32>
    %32 = arith.addf %30, %31 : vector<16x32xf32>
    %33 = vector.extract_strided_slice %1 {offsets = [0, 0], sizes = [32, 96], strides = [1, 1]} : vector<32x256xf32> to vector<32x96xf32>
    %cst_9 = arith.constant dense<0.000000e+00> : vector<16x96xf32>
    %34 = tpu.matmul %32, %33, %cst_9 {dimension_numbers = #tpu.dot_dimension_numbers<[1], [0], [0], [1], [0, 0, 1, 1], [], []>} : vector<16x32xf32>, vector<32x96xf32>, vector<16x96xf32> -> vector<16x96xf32>
    %35 = vector.broadcast %9 : vector<1x96xf32> to vector<16x96xf32>
    %36 = arith.addf %34, %35 : vector<16x96xf32>
    %37 = vector.extract_strided_slice %36 {offsets = [0, 32], sizes = [16, 64], strides = [1, 1]} : vector<16x96xf32> to vector<16x64xf32>
    %c0_10 = arith.constant 0 : index
    %c32 = arith.constant 32 : index
    %38 = vector.load %arg4[%c0_10, %c32] : memref<16x128xf32, #tpu.memory_space<vmem>>, vector<16x64xf32>
    tpu.vector_store %arg4[%c0_10, %c32], %37 {strides = array<i32>} : memref<16x128xf32, #tpu.memory_space<vmem>>, vector<16x64xf32>,
    %cst_11 = arith.constant 0.000000e+00 : f32
    %39 = vector.broadcast %cst_11 : f32 to vector<16x32xf32>
    %c0_12 = arith.constant 0 : index
    %c96 = arith.constant 96 : index
    %40 = vector.load %arg4[%c0_12, %c96] : memref<16x128xf32, #tpu.memory_space<vmem>>, vector<16x32xf32>
    tpu.vector_store %arg4[%c0_12, %c96], %39 {strides = array<i32>} : memref<16x128xf32, #tpu.memory_space<vmem>>, vector<16x32xf32>,
    %41 = vector.extract_strided_slice %36 {offsets = [0, 0], sizes = [16, 8], strides = [1, 1]} : vector<16x96xf32> to vector<16x8xf32>
    %42 = vector.extract_strided_slice %36 {offsets = [0, 8], sizes = [16, 8], strides = [1, 1]} : vector<16x96xf32> to vector<16x8xf32>
    %43 = vector.extract_strided_slice %36 {offsets = [0, 16], sizes = [16, 8], strides = [1, 1]} : vector<16x96xf32> to vector<16x8xf32>
    %44 = vector.extract_strided_slice %36 {offsets = [0, 24], sizes = [16, 8], strides = [1, 1]} : vector<16x96xf32> to vector<16x8xf32>
    %45 = vector.shape_cast %41 : vector<16x8xf32> to vector<1x16x8xf32>
    %46 = vector.shape_cast %42 : vector<16x8xf32> to vector<1x16x8xf32>
    %47 = vector.shape_cast %43 : vector<16x8xf32> to vector<1x16x8xf32>
    %48 = vector.shape_cast %44 : vector<16x8xf32> to vector<1x16x8xf32>
    %49 = tpu.concatenate %45, %46, %47, %48 in 0 : vector<1x16x8xf32>, vector<1x16x8xf32>, vector<1x16x8xf32>, vector<1x16x8xf32> -> vector<4x16x8xf32>
    %50 = vector.extract_strided_slice %36 {offsets = [0, 32], sizes = [16, 8], strides = [1, 1]} : vector<16x96xf32> to vector<16x8xf32>
    %51 = vector.extract_strided_slice %36 {offsets = [0, 40], sizes = [16, 8], strides = [1, 1]} : vector<16x96xf32> to vector<16x8xf32>
    %52 = vector.extract_strided_slice %36 {offsets = [0, 48], sizes = [16, 8], strides = [1, 1]} : vector<16x96xf32> to vector<16x8xf32>
    %53 = vector.extract_strided_slice %36 {offsets = [0, 56], sizes = [16, 8], strides = [1, 1]} : vector<16x96xf32> to vector<16x8xf32>
    %54 = vector.shape_cast %50 : vector<16x8xf32> to vector<1x16x8xf32>
    %55 = vector.shape_cast %51 : vector<16x8xf32> to vector<1x16x8xf32>
    %56 = vector.shape_cast %52 : vector<16x8xf32> to vector<1x16x8xf32>
    %57 = vector.shape_cast %53 : vector<16x8xf32> to vector<1x16x8xf32>
    %58 = tpu.concatenate %54, %55, %56, %57 in 0 : vector<1x16x8xf32>, vector<1x16x8xf32>, vector<1x16x8xf32>, vector<1x16x8xf32> -> vector<4x16x8xf32>
    %59 = vector.extract_strided_slice %36 {offsets = [0, 64], sizes = [16, 8], strides = [1, 1]} : vector<16x96xf32> to vector<16x8xf32>
    %60 = vector.extract_strided_slice %36 {offsets = [0, 72], sizes = [16, 8], strides = [1, 1]} : vector<16x96xf32> to vector<16x8xf32>
    %61 = vector.extract_strided_slice %36 {offsets = [0, 80], sizes = [16, 8], strides = [1, 1]} : vector<16x96xf32> to vector<16x8xf32>
    %62 = vector.extract_strided_slice %36 {offsets = [0, 88], sizes = [16, 8], strides = [1, 1]} : vector<16x96xf32> to vector<16x8xf32>
    %63 = vector.shape_cast %59 : vector<16x8xf32> to vector<1x16x8xf32>
    %64 = vector.shape_cast %60 : vector<16x8xf32> to vector<1x16x8xf32>
    %65 = vector.shape_cast %61 : vector<16x8xf32> to vector<1x16x8xf32>
    %66 = vector.shape_cast %62 : vector<16x8xf32> to vector<1x16x8xf32>
    %67 = tpu.concatenate %63, %64, %65, %66 in 0 : vector<1x16x8xf32>, vector<1x16x8xf32>, vector<1x16x8xf32>, vector<1x16x8xf32> -> vector<4x16x8xf32>
    %68 = tpu.iota {dimensions = array<i32: 0>} : vector<16x16xi32>
    %69 = tpu.iota {dimensions = array<i32: 1>} : vector<16x16xi32>
    %c3_i32 = arith.constant 3 : i32
    %70 = vector.broadcast %c3_i32 : i32 to vector<16x16xi32>
    %71 = arith.shrsi %68, %70 : vector<16x16xi32>
    %c3_i32_13 = arith.constant 3 : i32
    %72 = vector.broadcast %c3_i32_13 : i32 to vector<16x16xi32>
    %73 = arith.shrsi %69, %72 : vector<16x16xi32>
    %74 = arith.cmpi eq, %71, %73 : vector<16x16xi32>
    %75 = arith.cmpi sle, %69, %68 : vector<16x16xi32>
    %76 = arith.andi %74, %75 : vector<16x16xi1>
    "tpu.trace_start"() <{level = 10 : i32, message = "hqd,hkd->hqk"}> : () -> ()
    %cst_14 = arith.constant dense<0.000000e+00> : vector<4x16x16xf32>
    %77 = tpu.matmul %49, %58, %cst_14 {dimension_numbers = #tpu.dot_dimension_numbers<[2], [2], [1], [1], [0, 0, 0, 1, 1, 1], [0], [0]>} : vector<4x16x8xf32>, vector<4x16x8xf32>, vector<4x16x16xf32> -> vector<4x16x16xf32>
    "tpu.trace_stop"() : () -> ()
    %78 = vector.shape_cast %76 : vector<16x16xi1> to vector<1x16x16xi1>
    %cst_15 = arith.constant -1.000000e+04 : f32
    %79 = vector.shape_cast %78 : vector<1x16x16xi1> to vector<1x16x16xi1>
    %80 = vector.broadcast %79 : vector<1x16x16xi1> to vector<4x16x16xi1>
    %81 = vector.broadcast %cst_15 : f32 to vector<4x16x16xf32>
    %82 = arith.select %80, %77, %81 : vector<4x16x16xi1>, vector<4x16x16xf32>
    %cst_16 = arith.constant dense<0xFF800000> : vector<4x16xf32>
    %83 = vector.multi_reduction <maximumf>, %82, %cst_16 [2] : vector<4x16x16xf32> to vector<4x16xf32>
    %84 = vector.shape_cast %83 : vector<4x16xf32> to vector<4x16x1xf32>
    %85 = vector.broadcast %84 : vector<4x16x1xf32> to vector<4x16x16xf32>
    %86 = arith.subf %82, %85 : vector<4x16x16xf32>
    %87 = math.exp %86 : vector<4x16x16xf32>
    %cst_17 = arith.constant dense<0.000000e+00> : vector<4x16xf32>
    %88 = vector.multi_reduction <add>, %87, %cst_17 [2] : vector<4x16x16xf32> to vector<4x16xf32>
    %89 = vector.shape_cast %88 : vector<4x16xf32> to vector<4x16x1xf32>
    %90 = tpu.reciprocal %89 {approx = true} : vector<4x16x1xf32> -> vector<4x16x1xf32>
    %91 = vector.broadcast %90 : vector<4x16x1xf32> to vector<4x16x16xf32>
    %92 = arith.mulf %87, %91 : vector<4x16x16xf32>
    "tpu.trace_start"() <{level = 10 : i32, message = "hqk,hkd->hqd"}> : () -> ()
    %cst_18 = arith.constant dense<0.000000e+00> : vector<4x16x8xf32>
    %93 = tpu.matmul %92, %67, %cst_18 {dimension_numbers = #tpu.dot_dimension_numbers<[2], [1], [1], [2], [0, 0, 0, 1, 1, 2], [0], [0]>} : vector<4x16x16xf32>, vector<4x16x8xf32>, vector<4x16x8xf32> -> vector<4x16x8xf32>
    "tpu.trace_stop"() : () -> ()
    %94 = vector.extract_strided_slice %93 {offsets = [0, 0, 0], sizes = [1, 16, 8], strides = [1, 1, 1]} : vector<4x16x8xf32> to vector<1x16x8xf32>
    %95 = vector.shape_cast %94 : vector<1x16x8xf32> to vector<16x8xf32>
    %96 = vector.extract_strided_slice %93 {offsets = [1, 0, 0], sizes = [1, 16, 8], strides = [1, 1, 1]} : vector<4x16x8xf32> to vector<1x16x8xf32>
    %97 = vector.shape_cast %96 : vector<1x16x8xf32> to vector<16x8xf32>
    %98 = vector.extract_strided_slice %93 {offsets = [2, 0, 0], sizes = [1, 16, 8], strides = [1, 1, 1]} : vector<4x16x8xf32> to vector<1x16x8xf32>
    %99 = vector.shape_cast %98 : vector<1x16x8xf32> to vector<16x8xf32>
    %100 = vector.extract_strided_slice %93 {offsets = [3, 0, 0], sizes = [1, 16, 8], strides = [1, 1, 1]} : vector<4x16x8xf32> to vector<1x16x8xf32>
    %101 = vector.shape_cast %100 : vector<1x16x8xf32> to vector<16x8xf32>
    %102 = tpu.concatenate %95, %97, %99, %101 in 1 : vector<16x8xf32>, vector<16x8xf32>, vector<16x8xf32>, vector<16x8xf32> -> vector<16x32xf32>
    %103 = vector.extract_strided_slice %1 {offsets = [0, 96], sizes = [32, 32], strides = [1, 1]} : vector<32x256xf32> to vector<32x32xf32>
    %cst_19 = arith.constant dense<0.000000e+00> : vector<16x32xf32>
    %104 = tpu.matmul %102, %103, %cst_19 {dimension_numbers = #tpu.dot_dimension_numbers<[1], [0], [0], [1], [0, 0, 1, 1], [], []>} : vector<16x32xf32>, vector<32x32xf32>, vector<16x32xf32> -> vector<16x32xf32>
    %105 = vector.broadcast %7 : vector<1x32xf32> to vector<16x32xf32>
    %106 = arith.addf %104, %105 : vector<16x32xf32>
    %107 = arith.addf %0, %106 : vector<16x32xf32>
    %cst_20 = arith.constant dense<0.000000e+00> : vector<16xf32>
    %108 = vector.multi_reduction <add>, %107, %cst_20 [1] : vector<16x32xf32> to vector<16xf32>
    %109 = vector.shape_cast %108 : vector<16xf32> to vector<16x1xf32>
    %cst_21 = arith.constant 3.200000e+01 : f32
    %110 = vector.broadcast %cst_21 : f32 to vector<16x1xf32>
    %111 = arith.divf %109, %110 : vector<16x1xf32>
    %112 = vector.broadcast %111 : vector<16x1xf32> to vector<16x32xf32>
    %113 = arith.subf %107, %112 : vector<16x32xf32>
    %114 = arith.mulf %113, %113 : vector<16x32xf32>
    %cst_22 = arith.constant dense<0.000000e+00> : vector<16xf32>
    %115 = vector.multi_reduction <add>, %114, %cst_22 [1] : vector<16x32xf32> to vector<16xf32>
    %116 = vector.shape_cast %115 : vector<16xf32> to vector<16x1xf32>
    %cst_23 = arith.constant 3.200000e+01 : f32
    %117 = vector.broadcast %cst_23 : f32 to vector<16x1xf32>
    %118 = arith.divf %116, %117 : vector<16x1xf32>
    %119 = vector.broadcast %111 : vector<16x1xf32> to vector<16x32xf32>
    %120 = arith.subf %107, %119 : vector<16x32xf32>
    %cst_24 = arith.constant 9.99999974E-6 : f32
    %121 = vector.broadcast %cst_24 : f32 to vector<16x1xf32>
    %122 = arith.addf %118, %121 : vector<16x1xf32>
    %123 = math.rsqrt %122 : vector<16x1xf32>
    %124 = vector.broadcast %123 : vector<16x1xf32> to vector<16x32xf32>
    %125 = arith.mulf %120, %124 : vector<16x32xf32>
    %126 = vector.broadcast %5 : vector<1x32xf32> to vector<16x32xf32>
    %127 = arith.mulf %125, %126 : vector<16x32xf32>
    %128 = vector.broadcast %6 : vector<1x32xf32> to vector<16x32xf32>
    %129 = arith.addf %127, %128 : vector<16x32xf32>
    %130 = vector.extract_strided_slice %1 {offsets = [0, 128], sizes = [32, 128], strides = [1, 1]} : vector<32x256xf32> to vector<32x128xf32>
    %cst_25 = arith.constant dense<0.000000e+00> : vector<16x128xf32>
    %131 = tpu.matmul %129, %130, %cst_25 {dimension_numbers = #tpu.dot_dimension_numbers<[1], [0], [0], [1], [0, 0, 1, 1], [], []>} : vector<16x32xf32>, vector<32x128xf32>, vector<16x128xf32> -> vector<16x128xf32>
    %132 = vector.broadcast %10 : vector<1x128xf32> to vector<16x128xf32>
    %133 = arith.addf %131, %132 : vector<16x128xf32>
    %cst_26 = arith.constant 5.000000e-01 : f32
    %134 = vector.broadcast %cst_26 : f32 to vector<16x128xf32>
    %135 = arith.mulf %134, %133 : vector<16x128xf32>
    %cst_27 = arith.constant 4.471500e-02 : f32
    %136 = vector.broadcast %cst_27 : f32 to vector<16x128xf32>
    %137 = arith.mulf %136, %133 : vector<16x128xf32>
    %138 = arith.mulf %137, %133 : vector<16x128xf32>
    %139 = arith.mulf %138, %133 : vector<16x128xf32>
    %140 = arith.addf %133, %139 : vector<16x128xf32>
    %cst_28 = arith.constant 0.797884583 : f32
    %141 = vector.broadcast %cst_28 : f32 to vector<16x128xf32>
    %142 = arith.mulf %141, %140 : vector<16x128xf32>
    %143 = math.tanh %142 : vector<16x128xf32>
    %cst_29 = arith.constant 1.000000e+00 : f32
    %144 = vector.broadcast %cst_29 : f32 to vector<16x128xf32>
    %145 = arith.addf %144, %143 : vector<16x128xf32>
    %146 = arith.mulf %135, %145 : vector<16x128xf32>
    %c0_30 = arith.constant 0 : index
    %c0_31 = arith.constant 0 : index
    %147 = vector.load %arg2[%c0_30, %c0_31] : memref<128x32xf32, #tpu.memory_space<vmem>>, vector<128x32xf32>
    %cst_32 = arith.constant dense<0.000000e+00> : vector<16x32xf32>
    %148 = tpu.matmul %146, %147, %cst_32 {dimension_numbers = #tpu.dot_dimension_numbers<[1], [0], [0], [1], [0, 0, 1, 1], [], []>} : vector<16x128xf32>, vector<128x32xf32>, vector<16x32xf32> -> vector<16x32xf32>
    %149 = vector.broadcast %8 : vector<1x32xf32> to vector<16x32xf32>
    %150 = arith.addf %148, %149 : vector<16x32xf32>
    %151 = arith.addf %107, %150 : vector<16x32xf32>
    %c0_33 = arith.constant 0 : index
    %c0_34 = arith.constant 0 : index
    %152 = vector.load %arg4[%c0_33, %c0_34] : memref<16x128xf32, #tpu.memory_space<vmem>>, vector<16x32xf32>
    tpu.vector_store %arg4[%c0_33, %c0_34], %151 {strides = array<i32>} : memref<16x128xf32, #tpu.memory_space<vmem>>, vector<16x32xf32>,
    return
  }
}

</mosaic_0001>

<llo_original>
// kernel: block_forward.1
$region0: #{block_forward.1}
  #allocation0 [shape = 'u32[]', space=smem, size = 0x4, offset = 0x4, fixed_abs, tag = 'smem constant byte address 0x4 - core index']
  #allocation1 [shape = 'u32[144,128]{1,0:T(1,128)}', space=vmem, size = 0x12000, scoped, tag = 'internal scratch']
  %s0 = inlined_call_operand.vmem [shape: f32[16,32], index: 0, kind: input, shape index: {}]
  %s1 = inlined_call_operand.vmem [shape: f32[32,256], index: 1, kind: input, shape index: {}]
  %s2 = inlined_call_operand.vmem [shape: f32[128,32], index: 2, kind: input, shape index: {}]
  %s3 = inlined_call_operand.vmem [shape: f32[8,128], index: 3, kind: input, shape index: {}]
  %s4 = inlined_call_operand.vmem [shape: f32[16,128], index: 4, kind: output, shape index: {}]
  %s5 = sld [smem:[#allocation0]]
  $region26: #{block_forward.1} parent=0
    _
  %s7 = ssub.s32 1, %s5
  %s8 = scalar_select 0, %s7, %s5
  // Predicated region
  $region2: #{block_forward.1} parent=0 // pred_check
    _
  $region3: #{block_forward.1} parent=0 // pred_check_branch
    %10 = sbr.rel (0) target = $region5
  $region4: #{block_forward.1} parent=0 // pred_region
    _
  $region5: #{block_forward.1} parent=0 // pred_fallthru
    _
  // Predicated region
  $region6: #{block_forward.1} parent=0 // pred_check
    _
  $region7: #{block_forward.1} parent=0 // pred_check_branch
    %12 = sbr.rel (0) target = $region9
  $region8: #{block_forward.1} parent=0 // pred_region
    _
  $region9: #{block_forward.1} parent=0 // pred_fallthru
    _
  // Predicated region
  $region10: #{block_forward.1} parent=0 // pred_check
    _
  $region11: #{block_forward.1} parent=0 // pred_check_branch
    %14 = sbr.rel (0) target = $region13
  $region12: #{block_forward.1} parent=0 // pred_region
    _
  $region13: #{block_forward.1} parent=0 // pred_fallthru
    _
  // Predicated region
  $region14: #{block_forward.1} parent=0 // pred_check
    _
  $region15: #{block_forward.1} parent=0 // pred_check_branch
    %16 = sbr.rel (0) target = $region17
  $region16: #{block_forward.1} parent=0 // pred_region
    _
  $region17: #{block_forward.1} parent=0 // pred_fallthru
    _
  %v17 = vld [vmem:[%s0] sm:$0xff]
  %v18 = vld [vmem:[%s0 + $0x8] sm:$0xff]
  %v19 = vld [vmem:[%s1] sm:$0xff]
  %v20 = vld [vmem:[%s1 + $0x8] sm:$0xff]
  %v21 = vld [vmem:[%s1 + $0x10] sm:$0xff]
  %v22 = vld [vmem:[%s1 + $0x18] sm:$0xff]
  %v23 = vld [vmem:[%s1 + $0x20] sm:$0xff]
  %v24 = vld [vmem:[%s1 + $0x28] sm:$0xff]
  %v25 = vld [vmem:[%s1 + $0x30] sm:$0xff]
  %v26 = vld [vmem:[%s1 + $0x38] sm:$0xff]
  %v27 = vld [vmem:[%s3] sm:$0xff]
  %vm28 = vcmask 261120
  %v29 = vsel %vm28, %v17, 0.0
  %30 = vadd.xlane.f32.xlu0 %v29
  %v31 = vpop.xlane.xlu0 %30
  %v32 = vsel %vm28, %v18, 0.0
  %33 = vadd.xlane.f32.xlu0 %v32
  %v34 = vpop.xlane.xlu0 %33
  %v35 = vrcp.pop 32.0
  %v36 = vmul.f32 %v31, %v35
  %v37 = vmul.f32 %v34, %v35
  %v38 = vsub.f32 %v17, %v36
  %v39 = vsub.f32 %v18, %v37
  %v40 = vmul.f32 %v38, %v38
  %v41 = vmul.f32 %v39, %v39
  %v42 = vsel %vm28, %v40, 0.0
  %43 = vadd.xlane.f32.xlu0 %v42
  %v44 = vpop.xlane.xlu0 %43
  %v45 = vsel %vm28, %v41, 0.0
  %46 = vadd.xlane.f32.xlu0 %v45
  %v47 = vpop.xlane.xlu0 %46
  %v48 = vmul.f32 %v44, %v35
  %v49 = vmul.f32 %v47, %v35
  %v50 = vadd.f32 %v48, 1e-05
  %v51 = vadd.f32 %v49, 1e-05
  %v52 = vrsqrt.pop %v50
  %v53 = vrsqrt.pop %v51
  %v54 = vmul.f32 %v38, %v52
  %v55 = vmul.f32 %v39, %v53
  %v56 = vlaneseq
  %v57 = vshrl.u32 %v56, 7
  %v58 = vsub.s32 0, %v57
  %v59 = vrot.slane %v27, %v58
  %v60 = vmul.f32 %v54, %v59
  %v61 = vmul.f32 %v55, %v59
  %63 = vrot.lane.b32.xlu0 %v59, 96
  %v64 = vpop.permute.xlu0 %63
  %v66 = vadd.f32 %v60, %v64
  %v67 = vadd.f32 %v61, %v64
  %v68 = vlaneseq
  %v69 = vshrl.u32 %v68, 7
  %v70 = vsub.s32 2, %v69
  %v71 = vrot.slane %v27, %v70
  %v73 = vsel %vm28, %v66, 0
  %v76 = vsel %vm28, %v67, 0
  %78 = vmatprep.subr.mxu0 0.0
  %79 = vmatpush1.msra.mxu0 %v19
  %80 = vmatprep.subr.mxu0 0.0
  %81 = vmatpush1.msra.mxu0 %v21
  %82 = vmatprep.subr.mxu0 0.0
  %83 = vmatpush1.msra.mxu0 %v23
  %84 = vmatprep.subr.mxu0 0.0
  %85 = vmatpush1.msra.mxu0 %v25
  %86 = vmatprep.subr.mxu0 0.0
  %87 = vmatpush1.msra.mxu0 0.0
  %88 = vmatprep.subr.mxu0 0.0
  %89 = vmatpush1.msra.mxu0 0.0
  %90 = vmatprep.subr.mxu0 0.0
  %91 = vmatpush1.msra.mxu0 0.0
  %92 = vmatprep.subr.mxu0 0.0
  %93 = vmatpush1.msra.mxu0 0.0
  %94 = vmatprep.subr.mxu0 0.0
  %95 = vmatpush1.msra.mxu0 0.0
  %96 = vmatprep.subr.mxu0 0.0
  %97 = vmatpush1.msra.mxu0 0.0
  %98 = vmatprep.subr.mxu0 0.0
  %99 = vmatpush1.msra.mxu0 0.0
  %100 = vmatprep.subr.mxu0 0.0
  %101 = vmatpush1.msra.mxu0 0.0
  %102 = vmatprep.subr.mxu0 0.0
  %103 = vmatpush1.msra.mxu0 0.0
  %104 = vmatprep.subr.mxu0 0.0
  %105 = vmatpush1.msra.mxu0 0.0
  %106 = vmatprep.subr.mxu0 0.0
  %107 = vmatpush1.msra.mxu0 0.0
  %108 = vmatprep.subr.mxu0 0.0
  %109 = vmatpush1.msra.mxu0 0.0
  %110 = vmatprep.subr.mxu0 0.0
  %111 = vmatpush1.msra.mxu0 0.0
  %112 = vmatprep.subr.mxu0 0.0
  %113 = vmatpush1.msra.mxu0 0.0
  %114 = vmatprep.subr.mxu0 0.0
  %115 = vmatpush1.msra.mxu0 0.0
  %116 = vmatprep.subr.mxu0 0.0
  %117 = vmatpush1.msra.mxu0 0.0
  %118 = vmatprep.subr.mxu0 0.0
  %119 = vmatpush1.msra.mxu0 0.0
  %120 = vmatprep.subr.mxu0 0.0
  %121 = vmatpush1.msra.mxu0 0.0
  %122 = vmatprep.subr.mxu0 0.0
  %123 = vmatpush1.msra.mxu0 0.0
  %124 = vmatprep.subr.mxu0 0.0
  %125 = vmatpush1.msra.mxu0 0.0
  %126 = vmatprep.subr.mxu0 0.0
  %127 = vmatpush1.msra.mxu0 0.0
  %128 = vmatprep.subr.mxu0 0.0
  %129 = vmatpush1.msra.mxu0 0.0
  %130 = vmatprep.subr.mxu0 0.0
  %131 = vmatpush1.msra.mxu0 0.0
  %132 = vmatprep.subr.mxu0 0.0
  %133 = vmatpush1.msra.mxu0 0.0
  %134 = vmatprep.subr.mxu0 0.0
  %135 = vmatpush1.msra.mxu0 0.0
  %136 = vmatprep.subr.mxu0 0.0
  %137 = vmatpush1.msra.mxu0 0.0
  %138 = vmatprep.subr.mxu0 0.0
  %139 = vmatpush1.msra.mxu0 0.0
  %140 = vmatprep.subr.mxu0 0.0
  %141 = vmatpush1.msra.mxu0 0.0
  %142 = vmatprep.mubr.f32.mxu0 0.0
  %143 = vmatmul.mubr.f32.gmra.mrb[0].mxu0 %v73
  %v144 = vpop.f32.mrb[0].mxu0
  %v145 = vadd.f32 %v71, %v144
  %v146 = vpop.f32.mrb[0].mxu0
  %147 = vmatprep.mubr.f32.mxu0 0.0
  %148 = vmatmul.mubr.f32.gmra.mrb[0].mxu0 %v76
  %v149 = vpop.f32.mrb[0].mxu0
  %v150 = vadd.f32 %v71, %v149
  %v151 = vpop.f32.mrb[0].mxu0
  %152 = vdwg.mxu0
  %vm153 = vcmask 785664
  %154 = vst.msk [vmem:[%s4] sm:$0xff] %vm153, %v145
  %155 = vst.msk [vmem:[%s4 + $0x8] sm:$0xff] %vm153, %v150
  %vm156 = vcmask 1048320
  %157 = vst.msk [vmem:[%s4] sm:$0xff] %vm156, 0.0
  %158 = vst.msk [vmem:[%s4 + $0x8] sm:$0xff] %vm156, 0.0
  %161 = vrot.lane.b32.xlu0 %v145, 120
  %v162 = vpop.permute.xlu0 %161
  %163 = vrot.lane.b32.xlu0 %v150, 120
  %v164 = vpop.permute.xlu0 %163
  %165 = vrot.lane.b32.xlu0 %v145, 112
  %v166 = vpop.permute.xlu0 %165
  %167 = vrot.lane.b32.xlu0 %v150, 112
  %v168 = vpop.permute.xlu0 %167
  %169 = vrot.lane.b32.xlu0 %v145, 104
  %v170 = vpop.permute.xlu0 %169
  %171 = vrot.lane.b32.xlu0 %v150, 104
  %v172 = vpop.permute.xlu0 %171
  %v173 = vlaneseq
  %v174 = vshrl.u32 %v173, 7
  %v175 = vadd.s32 %v174, 8
  %v176 = vlaneseq
  %v177 = vand.u32 %v176, 127
  %v178 = vshra.s32 %v174, 3
  %v179 = vshra.s32 %v175, 3
  %v180 = vshra.s32 %v177, 3
  %vm181 = vcmp.eq.s32.totalorder %v178, %v180
  %vm182 = vcmp.eq.s32.totalorder %v179, %v180
  %vm183 = vcmp.le.s32.totalorder %v177, %v174
  %vm184 = vcmp.le.s32.totalorder %v177, %v175
  %vm185 = vmand %vm181, %vm183
  %vm186 = vmand %vm182, %vm184
  %187 = vrot.lane.b32.xlu0 %v145, 96
  %v188 = vpop.permute.xlu0 %187
  %189 = vrot.lane.b32.xlu0 %v150, 96
  %v190 = vpop.permute.xlu0 %189
  %vm191 = vcmask 64512
  %v192 = vsel %vm191, %v145, 0
  %v194 = vsel %vm191, %v150, 0
  %v196 = vsel %vm191, %v188, 0
  %v198 = vsel %vm191, %v190, 0
  %200 = vmatprep.subr.mxu0 0.0
  %201 = vmatpush1.xpose.msra.mxu0 %v196
  %202 = vmatprep.subr.mxu0 0.0
  %203 = vmatpush1.xpose.msra.mxu0 %v198
  %204 = vmatprep.subr.mxu0 0.0
  %205 = vmatpush1.xpose.msra.mxu0 0.0
  %206 = vmatprep.subr.mxu0 0.0
  %207 = vmatpush1.xpose.msra.mxu0 0.0
  %208 = vmatprep.subr.mxu0 0.0
  %209 = vmatpush1.xpose.msra.mxu0 0.0
  %210 = vmatprep.subr.mxu0 0.0
  %211 = vmatpush1.xpose.msra.mxu0 0.0
  %212 = vmatprep.subr.mxu0 0.0
  %213 = vmatpush1.xpose.msra.mxu0 0.0
  %214 = vmatprep.subr.mxu0 0.0
  %215 = vmatpush1.xpose.msra.mxu0 0.0
  %216 = vmatprep.subr.mxu0 0.0
  %217 = vmatpush1.xpose.msra.mxu0 0.0
  %218 = vmatprep.subr.mxu0 0.0
  %219 = vmatpush1.xpose.msra.mxu0 0.0
  %220 = vmatprep.subr.mxu0 0.0
  %221 = vmatpush1.xpose.msra.mxu0 0.0
  %222 = vmatprep.subr.mxu0 0.0
  %223 = vmatpush1.xpose.msra.mxu0 0.0
  %224 = vmatprep.subr.mxu0 0.0
  %225 = vmatpush1.xpose.msra.mxu0 0.0
  %226 = vmatprep.subr.mxu0 0.0
  %227 = vmatpush1.xpose.msra.mxu0 0.0
  %228 = vmatprep.subr.mxu0 0.0
  %229 = vmatpush1.xpose.msra.mxu0 0.0
  %230 = vmatprep.subr.mxu0 0.0
  %231 = vmatpush1.xpose.msra.mxu0 0.0
  %232 = vmatprep.subr.mxu0 0.0
  %233 = vmatpush1.xpose.msra.mxu0 0.0
  %234 = vmatprep.subr.mxu0 0.0
  %235 = vmatpush1.xpose.msra.mxu0 0.0
  %236 = vmatprep.subr.mxu0 0.0
  %237 = vmatpush1.xpose.msra.mxu0 0.0
  %238 = vmatprep.subr.mxu0 0.0
  %239 = vmatpush1.xpose.msra.mxu0 0.0
  %240 = vmatprep.subr.mxu0 0.0
  %241 = vmatpush1.xpose.msra.mxu0 0.0
  %242 = vmatprep.subr.mxu0 0.0
  %243 = vmatpush1.xpose.msra.mxu0 0.0
  %244 = vmatprep.subr.mxu0 0.0
  %245 = vmatpush1.xpose.msra.mxu0 0.0
  %246 = vmatprep.subr.mxu0 0.0
  %247 = vmatpush1.xpose.msra.mxu0 0.0
  %248 = vmatprep.subr.mxu0 0.0
  %249 = vmatpush1.xpose.msra.mxu0 0.0
  %250 = vmatprep.subr.mxu0 0.0
  %251 = vmatpush1.xpose.msra.mxu0 0.0
  %252 = vmatprep.subr.mxu0 0.0
  %253 = vmatpush1.xpose.msra.mxu0 0.0
  %254 = vmatprep.subr.mxu0 0.0
  %255 = vmatpush1.xpose.msra.mxu0 0.0
  %256 = vmatprep.subr.mxu0 0.0
  %257 = vmatpush1.xpose.msra.mxu0 0.0
  %258 = vmatprep.subr.mxu0 0.0
  %259 = vmatpush1.xpose.msra.mxu0 0.0
  %260 = vmatprep.subr.mxu0 0.0
  %261 = vmatpush1.xpose.msra.mxu0 0.0
  %262 = vmatprep.subr.mxu0 0.0
  %263 = vmatpush1.xpose.msra.mxu0 0.0
  %264 = vmatprep.mubr.f32.mxu0 0.0
  %265 = vmatmul.mubr.f32.gmra.mrb[0].mxu0 %v192
  %v266 = vpop.f32.mrb[0].mxu0
  %v267 = vadd.f32 0.0, %v266
  %v268 = vpop.f32.mrb[0].mxu0
  %269 = vmatprep.mubr.f32.mxu0 0.0
  %270 = vmatmul.mubr.f32.gmra.mrb[0].mxu0 %v194
  %v271 = vpop.f32.mrb[0].mxu0
  %v272 = vadd.f32 0.0, %v271
  %v273 = vpop.f32.mrb[0].mxu0
  %274 = vdwg.mxu0
  %275 = vrot.lane.b32.xlu0 %v162, 96
  %v276 = vpop.permute.xlu0 %275
  %277 = vrot.lane.b32.xlu0 %v164, 96
  %v278 = vpop.permute.xlu0 %277
  %v279 = vsel %vm191, %v162, 0
  %v281 = vsel %vm191, %v164, 0
  %v283 = vsel %vm191, %v276, 0
  %v285 = vsel %vm191, %v278, 0
  %287 = vmatprep.subr.mxu0 0.0
  %288 = vmatpush1.xpose.msra.mxu0 %v283
  %289 = vmatprep.subr.mxu0 0.0
  %290 = vmatpush1.xpose.msra.mxu0 %v285
  %291 = vmatprep.subr.mxu0 0.0
  %292 = vmatpush1.xpose.msra.mxu0 0.0
  %293 = vmatprep.subr.mxu0 0.0
  %294 = vmatpush1.xpose.msra.mxu0 0.0
  %295 = vmatprep.subr.mxu0 0.0
  %296 = vmatpush1.xpose.msra.mxu0 0.0
  %297 = vmatprep.subr.mxu0 0.0
  %298 = vmatpush1.xpose.msra.mxu0 0.0
  %299 = vmatprep.subr.mxu0 0.0
  %300 = vmatpush1.xpose.msra.mxu0 0.0
  %301 = vmatprep.subr.mxu0 0.0
  %302 = vmatpush1.xpose.msra.mxu0 0.0
  %303 = vmatprep.subr.mxu0 0.0
  %304 = vmatpush1.xpose.msra.mxu0 0.0
  %305 = vmatprep.subr.mxu0 0.0
  %306 = vmatpush1.xpose.msra.mxu0 0.0
  %307 = vmatprep.subr.mxu0 0.0
  %308 = vmatpush1.xpose.msra.mxu0 0.0
  %309 = vmatprep.subr.mxu0 0.0
  %310 = vmatpush1.xpose.msra.mxu0 0.0
  %311 = vmatprep.subr.mxu0 0.0
  %312 = vmatpush1.xpose.msra.mxu0 0.0
  %313 = vmatprep.subr.mxu0 0.0
  %314 = vmatpush1.xpose.msra.mxu0 0.0
  %315 = vmatprep.subr.mxu0 0.0
  %316 = vmatpush1.xpose.msra.mxu0 0.0
  %317 = vmatprep.subr.mxu0 0.0
  %318 = vmatpush1.xpose.msra.mxu0 0.0
  %319 = vmatprep.subr.mxu0 0.0
  %320 = vmatpush1.xpose.msra.mxu0 0.0
  %321 = vmatprep.subr.mxu0 0.0
  %322 = vmatpush1.xpose.msra.mxu0 0.0
  %323 = vmatprep.subr.mxu0 0.0
  %324 = vmatpush1.xpose.msra.mxu0 0.0
  %325 = vmatprep.subr.mxu0 0.0
  %326 = vmatpush1.xpose.msra.mxu0 0.0
  %327 = vmatprep.subr.mxu0 0.0
  %328 = vmatpush1.xpose.msra.mxu0 0.0
  %329 = vmatprep.subr.mxu0 0.0
  %330 = vmatpush1.xpose.msra.mxu0 0.0
  %331 = vmatprep.subr.mxu0 0.0
  %332 = vmatpush1.xpose.msra.mxu0 0.0
  %333 = vmatprep.subr.mxu0 0.0
  %334 = vmatpush1.xpose.msra.mxu0 0.0
  %335 = vmatprep.subr.mxu0 0.0
  %336 = vmatpush1.xpose.msra.mxu0 0.0
  %337 = vmatprep.subr.mxu0 0.0
  %338 = vmatpush1.xpose.msra.mxu0 0.0
  %339 = vmatprep.subr.mxu0 0.0
  %340 = vmatpush1.xpose.msra.mxu0 0.0
  %341 = vmatprep.subr.mxu0 0.0
  %342 = vmatpush1.xpose.msra.mxu0 0.0
  %343 = vmatprep.subr.mxu0 0.0
  %344 = vmatpush1.xpose.msra.mxu0 0.0
  %345 = vmatprep.subr.mxu0 0.0
  %346 = vmatpush1.xpose.msra.mxu0 0.0
  %347 = vmatprep.subr.mxu0 0.0
  %348 = vmatpush1.xpose.msra.mxu0 0.0
  %349 = vmatprep.subr.mxu0 0.0
  %350 = vmatpush1.xpose.msra.mxu0 0.0
  %351 = vmatprep.mubr.f32.mxu0 0.0
  %352 = vmatmul.mubr.f32.gmra.mrb[0].mxu0 %v279
  %v353 = vpop.f32.mrb[0].mxu0
  %v354 = vadd.f32 0.0, %v353
  %v355 = vpop.f32.mrb[0].mxu0
  %356 = vmatprep.mubr.f32.mxu0 0.0
  %357 = vmatmul.mubr.f32.gmra.mrb[0].mxu0 %v281
  %v358 = vpop.f32.mrb[0].mxu0
  %v359 = vadd.f32 0.0, %v358
  %v360 = vpop.f32.mrb[0].mxu0
  %361 = vdwg.mxu0
  %362 = vrot.lane.b32.xlu0 %v166, 96
  %v363 = vpop.permute.xlu0 %362
  %364 = vrot.lane.b32.xlu0 %v168, 96
  %v365 = vpop.permute.xlu0 %364
  %v366 = vsel %vm191, %v166, 0
  %v368 = vsel %vm191, %v168, 0
  %v370 = vsel %vm191, %v363, 0
  %v372 = vsel %vm191, %v365, 0
  %374 = vmatprep.subr.mxu0 0.0
  %375 = vmatpush1.xpose.msra.mxu0 %v370
  %376 = vmatprep.subr.mxu0 0.0
  %377 = vmatpush1.xpose.msra.mxu0 %v372
  %378 = vmatprep.subr.mxu0 0.0
  %379 = vmatpush1.xpose.msra.mxu0 0.0
  %380 = vmatprep.subr.mxu0 0.0
  %381 = vmatpush1.xpose.msra.mxu0 0.0
  %382 = vmatprep.subr.mxu0 0.0
  %383 = vmatpush1.xpose.msra.mxu0 0.0
  %384 = vmatprep.subr.mxu0 0.0
  %385 = vmatpush1.xpose.msra.mxu0 0.0
  %386 = vmatprep.subr.mxu0 0.0
  %387 = vmatpush1.xpose.msra.mxu0 0.0
  %388 = vmatprep.subr.mxu0 0.0
  %389 = vmatpush1.xpose.msra.mxu0 0.0
  %390 = vmatprep.subr.mxu0 0.0
  %391 = vmatpush1.xpose.msra.mxu0 0.0
  %392 = vmatprep.subr.mxu0 0.0
  %393 = vmatpush1.xpose.msra.mxu0 0.0
  %394 = vmatprep.subr.mxu0 0.0
  %395 = vmatpush1.xpose.msra.mxu0 0.0
  %396 = vmatprep.subr.mxu0 0.0
  %397 = vmatpush1.xpose.msra.mxu0 0.0
  %398 = vmatprep.subr.mxu0 0.0
  %399 = vmatpush1.xpose.msra.mxu0 0.0
  %400 = vmatprep.subr.mxu0 0.0
  %401 = vmatpush1.xpose.msra.mxu0 0.0
  %402 = vmatprep.subr.mxu0 0.0
  %403 = vmatpush1.xpose.msra.mxu0 0.0
  %404 = vmatprep.subr.mxu0 0.0
  %405 = vmatpush1.xpose.msra.mxu0 0.0
  %406 = vmatprep.subr.mxu0 0.0
  %407 = vmatpush1.xpose.msra.mxu0 0.0
  %408 = vmatprep.subr.mxu0 0.0
  %409 = vmatpush1.xpose.msra.mxu0 0.0
  %410 = vmatprep.subr.mxu0 0.0
  %411 = vmatpush1.xpose.msra.mxu0 0.0
  %412 = vmatprep.subr.mxu0 0.0
  %413 = vmatpush1.xpose.msra.mxu0 0.0
  %414 = vmatprep.subr.mxu0 0.0
  %415 = vmatpush1.xpose.msra.mxu0 0.0
  %416 = vmatprep.subr.mxu0 0.0
  %417 = vmatpush1.xpose.msra.mxu0 0.0
  %418 = vmatprep.subr.mxu0 0.0
  %419 = vmatpush1.xpose.msra.mxu0 0.0
  %420 = vmatprep.subr.mxu0 0.0
  %421 = vmatpush1.xpose.msra.mxu0 0.0
  %422 = vmatprep.subr.mxu0 0.0
  %423 = vmatpush1.xpose.msra.mxu0 0.0
  %424 = vmatprep.subr.mxu0 0.0
  %425 = vmatpush1.xpose.msra.mxu0 0.0
  %426 = vmatprep.subr.mxu0 0.0
  %427 = vmatpush1.xpose.msra.mxu0 0.0
  %428 = vmatprep.subr.mxu0 0.0
  %429 = vmatpush1.xpose.msra.mxu0 0.0
  %430 = vmatprep.subr.mxu0 0.0
  %431 = vmatpush1.xpose.msra.mxu0 0.0
  %432 = vmatprep.subr.mxu0 0.0
  %433 = vmatpush1.xpose.msra.mxu0 0.0
  %434 = vmatprep.subr.mxu0 0.0
  %435 = vmatpush1.xpose.msra.mxu0 0.0
  %436 = vmatprep.subr.mxu0 0.0
  %437 = vmatpush1.xpose.msra.mxu0 0.0
  %438 = vmatprep.mubr.f32.mxu0 0.0
  %439 = vmatmul.mubr.f32.gmra.mrb[0].mxu0 %v366
  %v440 = vpop.f32.mrb[0].mxu0
  %v441 = vadd.f32 0.0, %v440
  %v442 = vpop.f32.mrb[0].mxu0
  %443 = vmatprep.mubr.f32.mxu0 0.0
  %444 = vmatmul.mubr.f32.gmra.mrb[0].mxu0 %v368
  %v445 = vpop.f32.mrb[0].mxu0
  %v446 = vadd.f32 0.0, %v445
  %v447 = vpop.f32.mrb[0].mxu0
  %448 = vdwg.mxu0
  %449 = vrot.lane.b32.xlu0 %v170, 96
  %v450 = vpop.permute.xlu0 %449
  %451 = vrot.lane.b32.xlu0 %v172, 96
  %v452 = vpop.permute.xlu0 %451
  %v453 = vsel %vm191, %v170, 0
  %v455 = vsel %vm191, %v172, 0
  %v457 = vsel %vm191, %v450, 0
  %v459 = vsel %vm191, %v452, 0
  %461 = vmatprep.subr.mxu0 0.0
  %462 = vmatpush1.xpose.msra.mxu0 %v457
  %463 = vmatprep.subr.mxu0 0.0
  %464 = vmatpush1.xpose.msra.mxu0 %v459
  %465 = vmatprep.subr.mxu0 0.0
  %466 = vmatpush1.xpose.msra.mxu0 0.0
  %467 = vmatprep.subr.mxu0 0.0
  %468 = vmatpush1.xpose.msra.mxu0 0.0
  %469 = vmatprep.subr.mxu0 0.0
  %470 = vmatpush1.xpose.msra.mxu0 0.0
  %471 = vmatprep.subr.mxu0 0.0
  %472 = vmatpush1.xpose.msra.mxu0 0.0
  %473 = vmatprep.subr.mxu0 0.0
  %474 = vmatpush1.xpose.msra.mxu0 0.0
  %475 = vmatprep.subr.mxu0 0.0
  %476 = vmatpush1.xpose.msra.mxu0 0.0
  %477 = vmatprep.subr.mxu0 0.0
  %478 = vmatpush1.xpose.msra.mxu0 0.0
  %479 = vmatprep.subr.mxu0 0.0
  %480 = vmatpush1.xpose.msra.mxu0 0.0
  %481 = vmatprep.subr.mxu0 0.0
  %482 = vmatpush1.xpose.msra.mxu0 0.0
  %483 = vmatprep.subr.mxu0 0.0
  %484 = vmatpush1.xpose.msra.mxu0 0.0
  %485 = vmatprep.subr.mxu0 0.0
  %486 = vmatpush1.xpose.msra.mxu0 0.0
  %487 = vmatprep.subr.mxu0 0.0
  %488 = vmatpush1.xpose.msra.mxu0 0.0
  %489 = vmatprep.subr.mxu0 0.0
  %490 = vmatpush1.xpose.msra.mxu0 0.0
  %491 = vmatprep.subr.mxu0 0.0
  %492 = vmatpush1.xpose.msra.mxu0 0.0
  %493 = vmatprep.subr.mxu0 0.0
  %494 = vmatpush1.xpose.msra.mxu0 0.0
  %495 = vmatprep.subr.mxu0 0.0
  %496 = vmatpush1.xpose.msra.mxu0 0.0
  %497 = vmatprep.subr.mxu0 0.0
  %498 = vmatpush1.xpose.msra.mxu0 0.0
  %499 = vmatprep.subr.mxu0 0.0
  %500 = vmatpush1.xpose.msra.mxu0 0.0
  %501 = vmatprep.subr.mxu0 0.0
  %502 = vmatpush1.xpose.msra.mxu0 0.0
  %503 = vmatprep.subr.mxu0 0.0
  %504 = vmatpush1.xpose.msra.mxu0 0.0
  %505 = vmatprep.subr.mxu0 0.0
  %506 = vmatpush1.xpose.msra.mxu0 0.0
  %507 = vmatprep.subr.mxu0 0.0
  %508 = vmatpush1.xpose.msra.mxu0 0.0
  %509 = vmatprep.subr.mxu0 0.0
  %510 = vmatpush1.xpose.msra.mxu0 0.0
  %511 = vmatprep.subr.mxu0 0.0
  %512 = vmatpush1.xpose.msra.mxu0 0.0
  %513 = vmatprep.subr.mxu0 0.0
  %514 = vmatpush1.xpose.msra.mxu0 0.0
  %515 = vmatprep.subr.mxu0 0.0
  %516 = vmatpush1.xpose.msra.mxu0 0.0
  %517 = vmatprep.subr.mxu0 0.0
  %518 = vmatpush1.xpose.msra.mxu0 0.0
  %519 = vmatprep.subr.mxu0 0.0
  %520 = vmatpush1.xpose.msra.mxu0 0.0
  %521 = vmatprep.subr.mxu0 0.0
  %522 = vmatpush1.xpose.msra.mxu0 0.0
  %523 = vmatprep.subr.mxu0 0.0
  %524 = vmatpush1.xpose.msra.mxu0 0.0
  %525 = vmatprep.mubr.f32.mxu0 0.0
  %526 = vmatmul.mubr.f32.gmra.mrb[0].mxu0 %v453
  %v527 = vpop.f32.mrb[0].mxu0
  %v528 = vadd.f32 0.0, %v527
  %v529 = vpop.f32.mrb[0].mxu0
  %530 = vmatprep.mubr.f32.mxu0 0.0
  %531 = vmatmul.mubr.f32.gmra.mrb[0].mxu0 %v455
  %v532 = vpop.f32.mrb[0].mxu0
  %v533 = vadd.f32 0.0, %v532
  %v534 = vpop.f32.mrb[0].mxu0
  %535 = vdwg.mxu0
  %v536 = vsel %vm185, 1, 0
  %v537 = vsel %vm186, 1, 0
  %vm538 = vcmp.eq.s32.totalorder %v536, 1
  %vm539 = vcmp.eq.s32.totalorder %v537, 1
  %v540 = vsel %vm538, %v267, -10000.0
  %v541 = vsel %vm539, %v272, -10000.0
  %v542 = vsel %vm538, %v354, -10000.0
  %v543 = vsel %vm539, %v359, -10000.0
  %v544 = vsel %vm538, %v441, -10000.0
  %v545 = vsel %vm539, %v446, -10000.0
  %v546 = vsel %vm538, %v528, -10000.0
  %v547 = vsel %vm539, %v533, -10000.0
  %vm548 = vcmask 130048
  %v549 = vsel %vm548, %v540, -inf
  %550 = vmax.xlane.f32.xlu0 %v549
  %v551 = vpop.xlane.xlu0 %550
  %v552 = vsel %vm548, %v541, -inf
  %553 = vmax.xlane.f32.xlu0 %v552
  %v554 = vpop.xlane.xlu0 %553
  %v555 = vsel %vm548, %v542, -inf
  %556 = vmax.xlane.f32.xlu0 %v555
  %v557 = vpop.xlane.xlu0 %556
  %v558 = vsel %vm548, %v543, -inf
  %559 = vmax.xlane.f32.xlu0 %v558
  %v560 = vpop.xlane.xlu0 %559
  %v561 = vsel %vm548, %v544, -inf
  %562 = vmax.xlane.f32.xlu0 %v561
  %v563 = vpop.xlane.xlu0 %562
  %v564 = vsel %vm548, %v545, -inf
  %565 = vmax.xlane.f32.xlu0 %v564
  %v566 = vpop.xlane.xlu0 %565
  %v567 = vsel %vm548, %v546, -inf
  %568 = vmax.xlane.f32.xlu0 %v567
  %v569 = vpop.xlane.xlu0 %568
  %v570 = vsel %vm548, %v547, -inf
  %571 = vmax.xlane.f32.xlu0 %v570
  %v572 = vpop.xlane.xlu0 %571
  %v573 = vsub.f32 %v540, %v551
  %v574 = vsub.f32 %v541, %v554
  %v575 = vsub.f32 %v542, %v557
  %v576 = vsub.f32 %v543, %v560
  %v577 = vsub.f32 %v544, %v563
  %v578 = vsub.f32 %v545, %v566
  %v579 = vsub.f32 %v546, %v569
  %v580 = vsub.f32 %v547, %v572
  %v581 = vmul.f32 %v573, 1.442695
  %v582 = vpow.pop %v581
  %v583 = vmul.f32 %v574, 1.442695
  %v584 = vpow.pop %v583
  %v585 = vmul.f32 %v575, 1.442695
  %v586 = vpow.pop %v585
  %v587 = vmul.f32 %v576, 1.442695
  %v588 = vpow.pop %v587
  %v589 = vmul.f32 %v577, 1.442695
  %v590 = vpow.pop %v589
  %v591 = vmul.f32 %v578, 1.442695
  %v592 = vpow.pop %v591
  %v593 = vmul.f32 %v579, 1.442695
  %v594 = vpow.pop %v593
  %v595 = vmul.f32 %v580, 1.442695
  %v596 = vpow.pop %v595
  %v597 = vsel %vm548, %v582, 0.0
  %598 = vadd.xlane.f32.xlu0 %v597
  %v599 = vpop.xlane.xlu0 %598
  %v600 = vsel %vm548, %v584, 0.0
  %601 = vadd.xlane.f32.xlu0 %v600
  %v602 = vpop.xlane.xlu0 %601
  %v603 = vsel %vm548, %v586, 0.0
  %604 = vadd.xlane.f32.xlu0 %v603
  %v605 = vpop.xlane.xlu0 %604
  %v606 = vsel %vm548, %v588, 0.0
  %607 = vadd.xlane.f32.xlu0 %v606
  %v608 = vpop.xlane.xlu0 %607
  %v609 = vsel %vm548, %v590, 0.0
  %610 = vadd.xlane.f32.xlu0 %v609
  %v611 = vpop.xlane.xlu0 %610
  %v612 = vsel %vm548, %v592, 0.0
  %613 = vadd.xlane.f32.xlu0 %v612
  %v614 = vpop.xlane.xlu0 %613
  %v615 = vsel %vm548, %v594, 0.0
  %616 = vadd.xlane.f32.xlu0 %v615
  %v617 = vpop.xlane.xlu0 %616
  %v618 = vsel %vm548, %v596, 0.0
  %619 = vadd.xlane.f32.xlu0 %v618
  %v620 = vpop.xlane.xlu0 %619
  %v621 = vrcp.pop %v599
  %v622 = vrcp.pop %v602
  %v623 = vrcp.pop %v605
  %v624 = vrcp.pop %v608
  %v625 = vrcp.pop %v611
  %v626 = vrcp.pop %v614
  %v627 = vrcp.pop %v617
  %v628 = vrcp.pop %v620
  %v629 = vmul.f32 %v582, %v621
  %v630 = vmul.f32 %v584, %v622
  %v631 = vmul.f32 %v586, %v623
  %v632 = vmul.f32 %v588, %v624
  %v633 = vmul.f32 %v590, %v625
  %v634 = vmul.f32 %v592, %v626
  %v635 = vmul.f32 %v594, %v627
  %v636 = vmul.f32 %v596, %v628
  %637 = vrot.lane.b32.xlu0 %v145, 64
  %v638 = vpop.permute.xlu0 %637
  %639 = vrot.lane.b32.xlu0 %v150, 64
  %v640 = vpop.permute.xlu0 %639
  %v644 = vsel %vm548, %v629, 0
  %v647 = vsel %vm548, %v630, 0
  %649 = vmatprep.subr.mxu0 0.0
  %650 = vmatpush1.msra.mxu0 %v638
  %651 = vmatprep.subr.mxu0 0.0
  %652 = vmatpush1.msra.mxu0 %v640
  %653 = vmatprep.subr.mxu0 0.0
  %654 = vmatpush1.msra.mxu0 0.0
  %655 = vmatprep.subr.mxu0 0.0
  %656 = vmatpush1.msra.mxu0 0.0
  %657 = vmatprep.subr.mxu0 0.0
  %658 = vmatpush1.msra.mxu0 0.0
  %659 = vmatprep.subr.mxu0 0.0
  %660 = vmatpush1.msra.mxu0 0.0
  %661 = vmatprep.subr.mxu0 0.0
  %662 = vmatpush1.msra.mxu0 0.0
  %663 = vmatprep.subr.mxu0 0.0
  %664 = vmatpush1.msra.mxu0 0.0
  %665 = vmatprep.subr.mxu0 0.0
  %666 = vmatpush1.msra.mxu0 0.0
  %667 = vmatprep.subr.mxu0 0.0
  %668 = vmatpush1.msra.mxu0 0.0
  %669 = vmatprep.subr.mxu0 0.0
  %670 = vmatpush1.msra.mxu0 0.0
  %671 = vmatprep.subr.mxu0 0.0
  %672 = vmatpush1.msra.mxu0 0.0
  %673 = vmatprep.subr.mxu0 0.0
  %674 = vmatpush1.msra.mxu0 0.0
  %675 = vmatprep.subr.mxu0 0.0
  %676 = vmatpush1.msra.mxu0 0.0
  %677 = vmatprep.subr.mxu0 0.0
  %678 = vmatpush1.msra.mxu0 0.0
  %679 = vmatprep.subr.mxu0 0.0
  %680 = vmatpush1.msra.mxu0 0.0
  %681 = vmatprep.subr.mxu0 0.0
  %682 = vmatpush1.msra.mxu0 0.0
  %683 = vmatprep.subr.mxu0 0.0
  %684 = vmatpush1.msra.mxu0 0.0
  %685 = vmatprep.subr.mxu0 0.0
  %686 = vmatpush1.msra.mxu0 0.0
  %687 = vmatprep.subr.mxu0 0.0
  %688 = vmatpush1.msra.mxu0 0.0
  %689 = vmatprep.subr.mxu0 0.0
  %690 = vmatpush1.msra.mxu0 0.0
  %691 = vmatprep.subr.mxu0 0.0
  %692 = vmatpush1.msra.mxu0 0.0
  %693 = vmatprep.subr.mxu0 0.0
  %694 = vmatpush1.msra.mxu0 0.0
  %695 = vmatprep.subr.mxu0 0.0
  %696 = vmatpush1.msra.mxu0 0.0
  %697 = vmatprep.subr.mxu0 0.0
  %698 = vmatpush1.msra.mxu0 0.0
  %699 = vmatprep.subr.mxu0 0.0
  %700 = vmatpush1.msra.mxu0 0.0
  %701 = vmatprep.subr.mxu0 0.0
  %702 = vmatpush1.msra.mxu0 0.0
  %703 = vmatprep.subr.mxu0 0.0
  %704 = vmatpush1.msra.mxu0 0.0
  %705 = vmatprep.subr.mxu0 0.0
  %706 = vmatpush1.msra.mxu0 0.0
  %707 = vmatprep.subr.mxu0 0.0
  %708 = vmatpush1.msra.mxu0 0.0
  %709 = vmatprep.subr.mxu0 0.0
  %710 = vmatpush1.msra.mxu0 0.0
  %711 = vmatprep.subr.mxu0 0.0
  %712 = vmatpush1.msra.mxu0 0.0
  %713 = vmatprep.mubr.f32.mxu0 0.0
  %714 = vmatmul.mubr.f32.gmra.mrb[0].mxu0 %v644
  %v715 = vpop.f32.mrb[0].mxu0
  %v716 = vadd.f32 0.0, %v715
  %v717 = vpop.f32.mrb[0].mxu0
  %718 = vmatprep.mubr.f32.mxu0 0.0
  %719 = vmatmul.mubr.f32.gmra.mrb[0].mxu0 %v647
  %v720 = vpop.f32.mrb[0].mxu0
  %v721 = vadd.f32 0.0, %v720
  %v722 = vpop.f32.mrb[0].mxu0
  %723 = vdwg.mxu0
  %724 = vrot.lane.b32.xlu0 %v162, 64
  %v725 = vpop.permute.xlu0 %724
  %726 = vrot.lane.b32.xlu0 %v164, 64
  %v727 = vpop.permute.xlu0 %726
  %v731 = vsel %vm548, %v631, 0
  %v734 = vsel %vm548, %v632, 0
  %736 = vmatprep.subr.mxu0 0.0
  %737 = vmatpush1.msra.mxu0 %v725
  %738 = vmatprep.subr.mxu0 0.0
  %739 = vmatpush1.msra.mxu0 %v727
  %740 = vmatprep.subr.mxu0 0.0
  %741 = vmatpush1.msra.mxu0 0.0
  %742 = vmatprep.subr.mxu0 0.0
  %743 = vmatpush1.msra.mxu0 0.0
  %744 = vmatprep.subr.mxu0 0.0
  %745 = vmatpush1.msra.mxu0 0.0
  %746 = vmatprep.subr.mxu0 0.0
  %747 = vmatpush1.msra.mxu0 0.0
  %748 = vmatprep.subr.mxu0 0.0
  %749 = vmatpush1.msra.mxu0 0.0
  %750 = vmatprep.subr.mxu0 0.0
  %751 = vmatpush1.msra.mxu0 0.0
  %752 = vmatprep.subr.mxu0 0.0
  %753 = vmatpush1.msra.mxu0 0.0
  %754 = vmatprep.subr.mxu0 0.0
  %755 = vmatpush1.msra.mxu0 0.0
  %756 = vmatprep.subr.mxu0 0.0
  %757 = vmatpush1.msra.mxu0 0.0
  %758 = vmatprep.subr.mxu0 0.0
  %759 = vmatpush1.msra.mxu0 0.0
  %760 = vmatprep.subr.mxu0 0.0
  %761 = vmatpush1.msra.mxu0 0.0
  %762 = vmatprep.subr.mxu0 0.0
  %763 = vmatpush1.msra.mxu0 0.0
  %764 = vmatprep.subr.mxu0 0.0
  %765 = vmatpush1.msra.mxu0 0.0
  %766 = vmatprep.subr.mxu0 0.0
  %767 = vmatpush1.msra.mxu0 0.0
  %768 = vmatprep.subr.mxu0 0.0
  %769 = vmatpush1.msra.mxu0 0.0
  %770 = vmatprep.subr.mxu0 0.0
  %771 = vmatpush1.msra.mxu0 0.0
  %772 = vmatprep.subr.mxu0 0.0
  %773 = vmatpush1.msra.mxu0 0.0
  %774 = vmatprep.subr.mxu0 0.0
  %775 = vmatpush1.msra.mxu0 0.0
  %776 = vmatprep.subr.mxu0 0.0
  %777 = vmatpush1.msra.mxu0 0.0
  %778 = vmatprep.subr.mxu0 0.0
  %779 = vmatpush1.msra.mxu0 0.0
  %780 = vmatprep.subr.mxu0 0.0
  %781 = vmatpush1.msra.mxu0 0.0
  %782 = vmatprep.subr.mxu0 0.0
  %783 = vmatpush1.msra.mxu0 0.0
  %784 = vmatprep.subr.mxu0 0.0
  %785 = vmatpush1.msra.mxu0 0.0
  %786 = vmatprep.subr.mxu0 0.0
  %787 = vmatpush1.msra.mxu0 0.0
  %788 = vmatprep.subr.mxu0 0.0
  %789 = vmatpush1.msra.mxu0 0.0
  %790 = vmatprep.subr.mxu0 0.0
  %791 = vmatpush1.msra.mxu0 0.0
  %792 = vmatprep.subr.mxu0 0.0
  %793 = vmatpush1.msra.mxu0 0.0
  %794 = vmatprep.subr.mxu0 0.0
  %795 = vmatpush1.msra.mxu0 0.0
  %796 = vmatprep.subr.mxu0 0.0
  %797 = vmatpush1.msra.mxu0 0.0
  %798 = vmatprep.subr.mxu0 0.0
  %799 = vmatpush1.msra.mxu0 0.0
  %800 = vmatprep.mubr.f32.mxu0 0.0
  %801 = vmatmul.mubr.f32.gmra.mrb[0].mxu0 %v731
  %v802 = vpop.f32.mrb[0].mxu0
  %v803 = vadd.f32 0.0, %v802
  %v804 = vpop.f32.mrb[0].mxu0
  %805 = vmatprep.mubr.f32.mxu0 0.0
  %806 = vmatmul.mubr.f32.gmra.mrb[0].mxu0 %v734
  %v807 = vpop.f32.mrb[0].mxu0
  %v808 = vadd.f32 0.0, %v807
  %v809 = vpop.f32.mrb[0].mxu0
  %810 = vdwg.mxu0
  %811 = vrot.lane.b32.xlu0 %v166, 64
  %v812 = vpop.permute.xlu0 %811
  %813 = vrot.lane.b32.xlu0 %v168, 64
  %v814 = vpop.permute.xlu0 %813
  %v818 = vsel %vm548, %v633, 0
  %v821 = vsel %vm548, %v634, 0
  %823 = vmatprep.subr.mxu0 0.0
  %824 = vmatpush1.msra.mxu0 %v812
  %825 = vmatprep.subr.mxu0 0.0
  %826 = vmatpush1.msra.mxu0 %v814
  %827 = vmatprep.subr.mxu0 0.0
  %828 = vmatpush1.msra.mxu0 0.0
  %829 = vmatprep.subr.mxu0 0.0
  %830 = vmatpush1.msra.mxu0 0.0
  %831 = vmatprep.subr.mxu0 0.0
  %832 = vmatpush1.msra.mxu0 0.0
  %833 = vmatprep.subr.mxu0 0.0
  %834 = vmatpush1.msra.mxu0 0.0
  %835 = vmatprep.subr.mxu0 0.0
  %836 = vmatpush1.msra.mxu0 0.0
  %837 = vmatprep.subr.mxu0 0.0
  %838 = vmatpush1.msra.mxu0 0.0
  %839 = vmatprep.subr.mxu0 0.0
  %840 = vmatpush1.msra.mxu0 0.0
  %841 = vmatprep.subr.mxu0 0.0
  %842 = vmatpush1.msra.mxu0 0.0
  %843 = vmatprep.subr.mxu0 0.0
  %844 = vmatpush1.msra.mxu0 0.0
  %845 = vmatprep.subr.mxu0 0.0
  %846 = vmatpush1.msra.mxu0 0.0
  %847 = vmatprep.subr.mxu0 0.0
  %848 = vmatpush1.msra.mxu0 0.0
  %849 = vmatprep.subr.mxu0 0.0
  %850 = vmatpush1.msra.mxu0 0.0
  %851 = vmatprep.subr.mxu0 0.0
  %852 = vmatpush1.msra.mxu0 0.0
  %853 = vmatprep.subr.mxu0 0.0
  %854 = vmatpush1.msra.mxu0 0.0
  %855 = vmatprep.subr.mxu0 0.0
  %856 = vmatpush1.msra.mxu0 0.0
  %857 = vmatprep.subr.mxu0 0.0
  %858 = vmatpush1.msra.mxu0 0.0
  %859 = vmatprep.subr.mxu0 0.0
  %860 = vmatpush1.msra.mxu0 0.0
  %861 = vmatprep.subr.mxu0 0.0
  %862 = vmatpush1.msra.mxu0 0.0
  %863 = vmatprep.subr.mxu0 0.0
  %864 = vmatpush1.msra.mxu0 0.0
  %865 = vmatprep.subr.mxu0 0.0
  %866 = vmatpush1.msra.mxu0 0.0
  %867 = vmatprep.subr.mxu0 0.0
  %868 = vmatpush1.msra.mxu0 0.0
  %869 = vmatprep.subr.mxu0 0.0
  %870 = vmatpush1.msra.mxu0 0.0
  %871 = vmatprep.subr.mxu0 0.0
  %872 = vmatpush1.msra.mxu0 0.0
  %873 = vmatprep.subr.mxu0 0.0
  %874 = vmatpush1.msra.mxu0 0.0
  %875 = vmatprep.subr.mxu0 0.0
  %876 = vmatpush1.msra.mxu0 0.0
  %877 = vmatprep.subr.mxu0 0.0
  %878 = vmatpush1.msra.mxu0 0.0
  %879 = vmatprep.subr.mxu0 0.0
  %880 = vmatpush1.msra.mxu0 0.0
  %881 = vmatprep.subr.mxu0 0.0
  %882 = vmatpush1.msra.mxu0 0.0
  %883 = vmatprep.subr.mxu0 0.0
  %884 = vmatpush1.msra.mxu0 0.0
  %885 = vmatprep.subr.mxu0 0.0
  %886 = vmatpush1.msra.mxu0 0.0
  %887 = vmatprep.mubr.f32.mxu0 0.0
  %888 = vmatmul.mubr.f32.gmra.mrb[0].mxu0 %v818
  %v889 = vpop.f32.mrb[0].mxu0
  %v890 = vadd.f32 0.0, %v889
  %v891 = vpop.f32.mrb[0].mxu0
  %892 = vmatprep.mubr.f32.mxu0 0.0
  %893 = vmatmul.mubr.f32.gmra.mrb[0].mxu0 %v821
  %v894 = vpop.f32.mrb[0].mxu0
  %v895 = vadd.f32 0.0, %v894
  %v896 = vpop.f32.mrb[0].mxu0
  %897 = vdwg.mxu0
  %898 = vrot.lane.b32.xlu0 %v170, 64
  %v899 = vpop.permute.xlu0 %898
  %900 = vrot.lane.b32.xlu0 %v172, 64
  %v901 = vpop.permute.xlu0 %900
  %v905 = vsel %vm548, %v635, 0
  %v908 = vsel %vm548, %v636, 0
  %910 = vmatprep.subr.mxu0 0.0
  %911 = vmatpush1.msra.mxu0 %v899
  %912 = vmatprep.subr.mxu0 0.0
  %913 = vmatpush1.msra.mxu0 %v901
  %914 = vmatprep.subr.mxu0 0.0
  %915 = vmatpush1.msra.mxu0 0.0
  %916 = vmatprep.subr.mxu0 0.0
  %917 = vmatpush1.msra.mxu0 0.0
  %918 = vmatprep.subr.mxu0 0.0
  %919 = vmatpush1.msra.mxu0 0.0
  %920 = vmatprep.subr.mxu0 0.0
  %921 = vmatpush1.msra.mxu0 0.0
  %922 = vmatprep.subr.mxu0 0.0
  %923 = vmatpush1.msra.mxu0 0.0
  %924 = vmatprep.subr.mxu0 0.0
  %925 = vmatpush1.msra.mxu0 0.0
  %926 = vmatprep.subr.mxu0 0.0
  %927 = vmatpush1.msra.mxu0 0.0
  %928 = vmatprep.subr.mxu0 0.0
  %929 = vmatpush1.msra.mxu0 0.0
  %930 = vmatprep.subr.mxu0 0.0
  %931 = vmatpush1.msra.mxu0 0.0
  %932 = vmatprep.subr.mxu0 0.0
  %933 = vmatpush1.msra.mxu0 0.0
  %934 = vmatprep.subr.mxu0 0.0
  %935 = vmatpush1.msra.mxu0 0.0
  %936 = vmatprep.subr.mxu0 0.0
  %937 = vmatpush1.msra.mxu0 0.0
  %938 = vmatprep.subr.mxu0 0.0
  %939 = vmatpush1.msra.mxu0 0.0
  %940 = vmatprep.subr.mxu0 0.0
  %941 = vmatpush1.msra.mxu0 0.0
  %942 = vmatprep.subr.mxu0 0.0
  %943 = vmatpush1.msra.mxu0 0.0
  %944 = vmatprep.subr.mxu0 0.0
  %945 = vmatpush1.msra.mxu0 0.0
  %946 = vmatprep.subr.mxu0 0.0
  %947 = vmatpush1.msra.mxu0 0.0
  %948 = vmatprep.subr.mxu0 0.0
  %949 = vmatpush1.msra.mxu0 0.0
  %950 = vmatprep.subr.mxu0 0.0
  %951 = vmatpush1.msra.mxu0 0.0
  %952 = vmatprep.subr.mxu0 0.0
  %953 = vmatpush1.msra.mxu0 0.0
  %954 = vmatprep.subr.mxu0 0.0
  %955 = vmatpush1.msra.mxu0 0.0
  %956 = vmatprep.subr.mxu0 0.0
  %957 = vmatpush1.msra.mxu0 0.0
  %958 = vmatprep.subr.mxu0 0.0
  %959 = vmatpush1.msra.mxu0 0.0
  %960 = vmatprep.subr.mxu0 0.0
  %961 = vmatpush1.msra.mxu0 0.0
  %962 = vmatprep.subr.mxu0 0.0
  %963 = vmatpush1.msra.mxu0 0.0
  %964 = vmatprep.subr.mxu0 0.0
  %965 = vmatpush1.msra.mxu0 0.0
  %966 = vmatprep.subr.mxu0 0.0
  %967 = vmatpush1.msra.mxu0 0.0
  %968 = vmatprep.subr.mxu0 0.0
  %969 = vmatpush1.msra.mxu0 0.0
  %970 = vmatprep.subr.mxu0 0.0
  %971 = vmatpush1.msra.mxu0 0.0
  %972 = vmatprep.subr.mxu0 0.0
  %973 = vmatpush1.msra.mxu0 0.0
  %974 = vmatprep.mubr.f32.mxu0 0.0
  %975 = vmatmul.mubr.f32.gmra.mrb[0].mxu0 %v905
  %v976 = vpop.f32.mrb[0].mxu0
  %v977 = vadd.f32 0.0, %v976
  %v978 = vpop.f32.mrb[0].mxu0
  %979 = vmatprep.mubr.f32.mxu0 0.0
  %980 = vmatmul.mubr.f32.gmra.mrb[0].mxu0 %v908
  %v981 = vpop.f32.mrb[0].mxu0
  %v982 = vadd.f32 0.0, %v981
  %v983 = vpop.f32.mrb[0].mxu0
  %984 = vdwg.mxu0
  %987 = vrot.lane.b32.xlu0 %v803, 8
  %v988 = vpop.permute.xlu0 %987
  %989 = vrot.lane.b32.xlu0 %v808, 8
  %v990 = vpop.permute.xlu0 %989
  %995 = vrot.lane.b32.xlu0 %v890, 16
  %v996 = vpop.permute.xlu0 %995
  %997 = vrot.lane.b32.xlu0 %v895, 16
  %v998 = vpop.permute.xlu0 %997
  %1003 = vrot.lane.b32.xlu0 %v977, 24
  %v1004 = vpop.permute.xlu0 %1003
  %1005 = vrot.lane.b32.xlu0 %v982, 24
  %v1006 = vpop.permute.xlu0 %1005
  %v1009 = vsel %vm191, %v716, %v988
  %v1010 = vsel %vm191, %v721, %v990
  %v1011 = vsel %vm548, %v1009, %v996
  %v1012 = vsel %vm548, %v1010, %v998
  %vm1013 = vcmask 195584
  %v1014 = vsel %vm1013, %v1011, %v1004
  %v1015 = vsel %vm1013, %v1012, %v1006
  %v1016 = vlaneseq
  %v1017 = vshrl.u32 %v1016, 7
  %v1018 = vsub.s32 1, %v1017
  %v1019 = vrot.slane %v27, %v1018
  %1024 = vrot.lane.b32.xlu0 %v19, 32
  %v1025 = vpop.permute.xlu0 %1024
  %1026 = vrot.lane.b32.xlu0 %v21, 32
  %v1027 = vpop.permute.xlu0 %1026
  %1028 = vrot.lane.b32.xlu0 %v23, 32
  %v1029 = vpop.permute.xlu0 %1028
  %1030 = vrot.lane.b32.xlu0 %v25, 32
  %v1031 = vpop.permute.xlu0 %1030
  %v1037 = vsel %vm28, %v1014, 0
  %v1040 = vsel %vm28, %v1015, 0
  %1042 = vmatprep.subr.mxu0 0.0
  %1043 = vmatpush1.msra.mxu0 %v1025
  %1044 = vmatprep.subr.mxu0 0.0
  %1045 = vmatpush1.msra.mxu0 %v1027
  %1046 = vmatprep.subr.mxu0 0.0
  %1047 = vmatpush1.msra.mxu0 %v1029
  %1048 = vmatprep.subr.mxu0 0.0
  %1049 = vmatpush1.msra.mxu0 %v1031
  %1050 = vmatprep.subr.mxu0 0.0
  %1051 = vmatpush1.msra.mxu0 0.0
  %1052 = vmatprep.subr.mxu0 0.0
  %1053 = vmatpush1.msra.mxu0 0.0
  %1054 = vmatprep.subr.mxu0 0.0
  %1055 = vmatpush1.msra.mxu0 0.0
  %1056 = vmatprep.subr.mxu0 0.0
  %1057 = vmatpush1.msra.mxu0 0.0
  %1058 = vmatprep.subr.mxu0 0.0
  %1059 = vmatpush1.msra.mxu0 0.0
  %1060 = vmatprep.subr.mxu0 0.0
  %1061 = vmatpush1.msra.mxu0 0.0
  %1062 = vmatprep.subr.mxu0 0.0
  %1063 = vmatpush1.msra.mxu0 0.0
  %1064 = vmatprep.subr.mxu0 0.0
  %1065 = vmatpush1.msra.mxu0 0.0
  %1066 = vmatprep.subr.mxu0 0.0
  %1067 = vmatpush1.msra.mxu0 0.0
  %1068 = vmatprep.subr.mxu0 0.0
  %1069 = vmatpush1.msra.mxu0 0.0
  %1070 = vmatprep.subr.mxu0 0.0
  %1071 = vmatpush1.msra.mxu0 0.0
  %1072 = vmatprep.subr.mxu0 0.0
  %1073 = vmatpush1.msra.mxu0 0.0
  %1074 = vmatprep.subr.mxu0 0.0
  %1075 = vmatpush1.msra.mxu0 0.0
  %1076 = vmatprep.subr.mxu0 0.0
  %1077 = vmatpush1.msra.mxu0 0.0
  %1078 = vmatprep.subr.mxu0 0.0
  %1079 = vmatpush1.msra.mxu0 0.0
  %1080 = vmatprep.subr.mxu0 0.0
  %1081 = vmatpush1.msra.mxu0 0.0
  %1082 = vmatprep.subr.mxu0 0.0
  %1083 = vmatpush1.msra.mxu0 0.0
  %1084 = vmatprep.subr.mxu0 0.0
  %1085 = vmatpush1.msra.mxu0 0.0
  %1086 = vmatprep.subr.mxu0 0.0
  %1087 = vmatpush1.msra.mxu0 0.0
  %1088 = vmatprep.subr.mxu0 0.0
  %1089 = vmatpush1.msra.mxu0 0.0
  %1090 = vmatprep.subr.mxu0 0.0
  %1091 = vmatpush1.msra.mxu0 0.0
  %1092 = vmatprep.subr.mxu0 0.0
  %1093 = vmatpush1.msra.mxu0 0.0
  %1094 = vmatprep.subr.mxu0 0.0
  %1095 = vmatpush1.msra.mxu0 0.0
  %1096 = vmatprep.subr.mxu0 0.0
  %1097 = vmatpush1.msra.mxu0 0.0
  %1098 = vmatprep.subr.mxu0 0.0
  %1099 = vmatpush1.msra.mxu0 0.0
  %1100 = vmatprep.subr.mxu0 0.0
  %1101 = vmatpush1.msra.mxu0 0.0
  %1102 = vmatprep.subr.mxu0 0.0
  %1103 = vmatpush1.msra.mxu0 0.0
  %1104 = vmatprep.subr.mxu0 0.0
  %1105 = vmatpush1.msra.mxu0 0.0
  %1106 = vmatprep.mubr.f32.mxu0 0.0
  %1107 = vmatmul.mubr.f32.gmra.mrb[0].mxu0 %v1037
  %v1108 = vpop.f32.mrb[0].mxu0
  %v1109 = vadd.f32 %v1019, %v1108
  %v1110 = vpop.f32.mrb[0].mxu0
  %1111 = vmatprep.mubr.f32.mxu0 0.0
  %1112 = vmatmul.mubr.f32.gmra.mrb[0].mxu0 %v1040
  %v1113 = vpop.f32.mrb[0].mxu0
  %v1114 = vadd.f32 %v1019, %v1113
  %v1115 = vpop.f32.mrb[0].mxu0
  %1116 = vdwg.mxu0
  %v1117 = vadd.f32 %v17, %v1109
  %v1118 = vadd.f32 %v18, %v1114
  %v1119 = vsel %vm28, %v1117, 0.0
  %1120 = vadd.xlane.f32.xlu0 %v1119
  %v1121 = vpop.xlane.xlu0 %1120
  %v1122 = vsel %vm28, %v1118, 0.0
  %1123 = vadd.xlane.f32.xlu0 %v1122
  %v1124 = vpop.xlane.xlu0 %1123
  %v1125 = vmul.f32 %v1121, %v35
  %v1126 = vmul.f32 %v1124, %v35
  %v1127 = vsub.f32 %v1117, %v1125
  %v1128 = vsub.f32 %v1118, %v1126
  %v1129 = vmul.f32 %v1127, %v1127
  %v1130 = vmul.f32 %v1128, %v1128
  %v1131 = vsel %vm28, %v1129, 0.0
  %1132 = vadd.xlane.f32.xlu0 %v1131
  %v1133 = vpop.xlane.xlu0 %1132
  %v1134 = vsel %vm28, %v1130, 0.0
  %1135 = vadd.xlane.f32.xlu0 %v1134
  %v1136 = vpop.xlane.xlu0 %1135
  %v1137 = vmul.f32 %v1133, %v35
  %v1138 = vmul.f32 %v1136, %v35
  %v1139 = vadd.f32 %v1137, 1e-05
  %v1140 = vadd.f32 %v1138, 1e-05
  %v1141 = vrsqrt.pop %v1139
  %v1142 = vrsqrt.pop %v1140
  %v1143 = vmul.f32 %v1127, %v1141
  %v1144 = vmul.f32 %v1128, %v1142
  %1145 = vrot.lane.b32.xlu0 %v59, 64
  %v1146 = vpop.permute.xlu0 %1145
  %v1148 = vmul.f32 %v1143, %v1146
  %v1149 = vmul.f32 %v1144, %v1146
  %1150 = vrot.lane.b32.xlu0 %v59, 32
  %v1151 = vpop.permute.xlu0 %1150
  %v1153 = vadd.f32 %v1148, %v1151
  %v1154 = vadd.f32 %v1149, %v1151
  %v1155 = vlaneseq
  %v1156 = vshrl.u32 %v1155, 7
  %v1157 = vsub.s32 3, %v1156
  %v1158 = vrot.slane %v27, %v1157
  %v1160 = vsel %vm28, %v1153, 0
  %v1163 = vsel %vm28, %v1154, 0
  %1165 = vmatprep.subr.mxu0 0.0
  %1166 = vmatpush1.msra.mxu0 %v20
  %1167 = vmatprep.subr.mxu0 0.0
  %1168 = vmatpush1.msra.mxu0 %v22
  %1169 = vmatprep.subr.mxu0 0.0
  %1170 = vmatpush1.msra.mxu0 %v24
  %1171 = vmatprep.subr.mxu0 0.0
  %1172 = vmatpush1.msra.mxu0 %v26
  %1173 = vmatprep.subr.mxu0 0.0
  %1174 = vmatpush1.msra.mxu0 0.0
  %1175 = vmatprep.subr.mxu0 0.0
  %1176 = vmatpush1.msra.mxu0 0.0
  %1177 = vmatprep.subr.mxu0 0.0
  %1178 = vmatpush1.msra.mxu0 0.0
  %1179 = vmatprep.subr.mxu0 0.0
  %1180 = vmatpush1.msra.mxu0 0.0
  %1181 = vmatprep.subr.mxu0 0.0
  %1182 = vmatpush1.msra.mxu0 0.0
  %1183 = vmatprep.subr.mxu0 0.0
  %1184 = vmatpush1.msra.mxu0 0.0
  %1185 = vmatprep.subr.mxu0 0.0
  %1186 = vmatpush1.msra.mxu0 0.0
  %1187 = vmatprep.subr.mxu0 0.0
  %1188 = vmatpush1.msra.mxu0 0.0
  %1189 = vmatprep.subr.mxu0 0.0
  %1190 = vmatpush1.msra.mxu0 0.0
  %1191 = vmatprep.subr.mxu0 0.0
  %1192 = vmatpush1.msra.mxu0 0.0
  %1193 = vmatprep.subr.mxu0 0.0
  %1194 = vmatpush1.msra.mxu0 0.0
  %1195 = vmatprep.subr.mxu0 0.0
  %1196 = vmatpush1.msra.mxu0 0.0
  %1197 = vmatprep.subr.mxu0 0.0
  %1198 = vmatpush1.msra.mxu0 0.0
  %1199 = vmatprep.subr.mxu0 0.0
  %1200 = vmatpush1.msra.mxu0 0.0
  %1201 = vmatprep.subr.mxu0 0.0
  %1202 = vmatpush1.msra.mxu0 0.0
  %1203 = vmatprep.subr.mxu0 0.0
  %1204 = vmatpush1.msra.mxu0 0.0
  %1205 = vmatprep.subr.mxu0 0.0
  %1206 = vmatpush1.msra.mxu0 0.0
  %1207 = vmatprep.subr.mxu0 0.0
  %1208 = vmatpush1.msra.mxu0 0.0
  %1209 = vmatprep.subr.mxu0 0.0
  %1210 = vmatpush1.msra.mxu0 0.0
  %1211 = vmatprep.subr.mxu0 0.0
  %1212 = vmatpush1.msra.mxu0 0.0
  %1213 = vmatprep.subr.mxu0 0.0
  %1214 = vmatpush1.msra.mxu0 0.0
  %1215 = vmatprep.subr.mxu0 0.0
  %1216 = vmatpush1.msra.mxu0 0.0
  %1217 = vmatprep.subr.mxu0 0.0
  %1218 = vmatpush1.msra.mxu0 0.0
  %1219 = vmatprep.subr.mxu0 0.0
  %1220 = vmatpush1.msra.mxu0 0.0
  %1221 = vmatprep.subr.mxu0 0.0
  %1222 = vmatpush1.msra.mxu0 0.0
  %1223 = vmatprep.subr.mxu0 0.0
  %1224 = vmatpush1.msra.mxu0 0.0
  %1225 = vmatprep.subr.mxu0 0.0
  %1226 = vmatpush1.msra.mxu0 0.0
  %1227 = vmatprep.subr.mxu0 0.0
  %1228 = vmatpush1.msra.mxu0 0.0
  %1229 = vmatprep.mubr.f32.mxu0 0.0
  %1230 = vmatmul.mubr.f32.gmra.mrb[0].mxu0 %v1160
  %v1231 = vpop.f32.mrb[0].mxu0
  %v1232 = vadd.f32 %v1158, %v1231
  %v1233 = vpop.f32.mrb[0].mxu0
  %1234 = vmatprep.mubr.f32.mxu0 0.0
  %1235 = vmatmul.mubr.f32.gmra.mrb[0].mxu0 %v1163
  %v1236 = vpop.f32.mrb[0].mxu0
  %v1237 = vadd.f32 %v1158, %v1236
  %v1238 = vpop.f32.mrb[0].mxu0
  %1239 = vdwg.mxu0
  %v1240 = vmul.f32 %v1232, 0.5
  %v1241 = vmul.f32 %v1237, 0.5
  %v1242 = vmul.f32 %v1232, 0.044715
  %v1243 = vmul.f32 %v1237, 0.044715
  %v1244 = vmul.f32 %v1242, %v1232
  %v1245 = vmul.f32 %v1243, %v1237
  %v1246 = vmul.f32 %v1244, %v1232
  %v1247 = vmul.f32 %v1245, %v1237
  %v1248 = vadd.f32 %v1232, %v1246
  %v1249 = vadd.f32 %v1237, %v1247
  %v1250 = vmul.f32 %v1248, 0.7978846
  %v1251 = vmul.f32 %v1249, 0.7978846
  %v1252 = vtanh.pop %v1250
  %v1253 = vtanh.pop %v1251
  %v1254 = vadd.f32 %v1252, 1.0
  %v1255 = vadd.f32 %v1253, 1.0
  %v1256 = vmul.f32 %v1240, %v1254
  %v1257 = vmul.f32 %v1241, %v1255
  %v1258 = vld [vmem:[%s2] sm:$0xff]
  %v1259 = vld [vmem:[%s2 + $0x8] sm:$0xff]
  %v1260 = vld [vmem:[%s2 + $0x10] sm:$0xff]
  %v1261 = vld [vmem:[%s2 + $0x18] sm:$0xff]
  %v1262 = vld [vmem:[%s2 + $0x20] sm:$0xff]
  %v1263 = vld [vmem:[%s2 + $0x28] sm:$0xff]
  %v1264 = vld [vmem:[%s2 + $0x30] sm:$0xff]
  %v1265 = vld [vmem:[%s2 + $0x38] sm:$0xff]
  %v1266 = vld [vmem:[%s2 + $0x40] sm:$0xff]
  %v1267 = vld [vmem:[%s2 + $0x48] sm:$0xff]
  %v1268 = vld [vmem:[%s2 + $0x50] sm:$0xff]
  %v1269 = vld [vmem:[%s2 + $0x58] sm:$0xff]
  %v1270 = vld [vmem:[%s2 + $0x60] sm:$0xff]
  %v1271 = vld [vmem:[%s2 + $0x68] sm:$0xff]
  %v1272 = vld [vmem:[%s2 + $0x70] sm:$0xff]
  %v1273 = vld [vmem:[%s2 + $0x78] sm:$0xff]
  %1275 = vrot.lane.b32.xlu0 %v1019, 96
  %v1276 = vpop.permute.xlu0 %1275
  %1278 = vmatprep.subr.mxu0 0.0
  %1279 = vmatpush1.msra.mxu0 %v1258
  %1280 = vmatprep.subr.mxu0 0.0
  %1281 = vmatpush1.msra.mxu0 %v1259
  %1282 = vmatprep.subr.mxu0 0.0
  %1283 = vmatpush1.msra.mxu0 %v1260
  %1284 = vmatprep.subr.mxu0 0.0
  %1285 = vmatpush1.msra.mxu0 %v1261
  %1286 = vmatprep.subr.mxu0 0.0
  %1287 = vmatpush1.msra.mxu0 %v1262
  %1288 = vmatprep.subr.mxu0 0.0
  %1289 = vmatpush1.msra.mxu0 %v1263
  %1290 = vmatprep.subr.mxu0 0.0
  %1291 = vmatpush1.msra.mxu0 %v1264
  %1292 = vmatprep.subr.mxu0 0.0
  %1293 = vmatpush1.msra.mxu0 %v1265
  %1294 = vmatprep.subr.mxu0 0.0
  %1295 = vmatpush1.msra.mxu0 %v1266
  %1296 = vmatprep.subr.mxu0 0.0
  %1297 = vmatpush1.msra.mxu0 %v1267
  %1298 = vmatprep.subr.mxu0 0.0
  %1299 = vmatpush1.msra.mxu0 %v1268
  %1300 = vmatprep.subr.mxu0 0.0
  %1301 = vmatpush1.msra.mxu0 %v1269
  %1302 = vmatprep.subr.mxu0 0.0
  %1303 = vmatpush1.msra.mxu0 %v1270
  %1304 = vmatprep.subr.mxu0 0.0
  %1305 = vmatpush1.msra.mxu0 %v1271
  %1306 = vmatprep.subr.mxu0 0.0
  %1307 = vmatpush1.msra.mxu0 %v1272
  %1308 = vmatprep.subr.mxu0 0.0
  %1309 = vmatpush1.msra.mxu0 %v1273
  %1310 = vmatprep.subr.mxu0 0.0
  %1311 = vmatpush1.msra.mxu0 0.0
  %1312 = vmatprep.subr.mxu0 0.0
  %1313 = vmatpush1.msra.mxu0 0.0
  %1314 = vmatprep.subr.mxu0 0.0
  %1315 = vmatpush1.msra.mxu0 0.0
  %1316 = vmatprep.subr.mxu0 0.0
  %1317 = vmatpush1.msra.mxu0 0.0
  %1318 = vmatprep.subr.mxu0 0.0
  %1319 = vmatpush1.msra.mxu0 0.0
  %1320 = vmatprep.subr.mxu0 0.0
  %1321 = vmatpush1.msra.mxu0 0.0
  %1322 = vmatprep.subr.mxu0 0.0
  %1323 = vmatpush1.msra.mxu0 0.0
  %1324 = vmatprep.subr.mxu0 0.0
  %1325 = vmatpush1.msra.mxu0 0.0
  %1326 = vmatprep.subr.mxu0 0.0
  %1327 = vmatpush1.msra.mxu0 0.0
  %1328 = vmatprep.subr.mxu0 0.0
  %1329 = vmatpush1.msra.mxu0 0.0
  %1330 = vmatprep.subr.mxu0 0.0
  %1331 = vmatpush1.msra.mxu0 0.0
  %1332 = vmatprep.subr.mxu0 0.0
  %1333 = vmatpush1.msra.mxu0 0.0
  %1334 = vmatprep.subr.mxu0 0.0
  %1335 = vmatpush1.msra.mxu0 0.0
  %1336 = vmatprep.subr.mxu0 0.0
  %1337 = vmatpush1.msra.mxu0 0.0
  %1338 = vmatprep.subr.mxu0 0.0
  %1339 = vmatpush1.msra.mxu0 0.0
  %1340 = vmatprep.subr.mxu0 0.0
  %1341 = vmatpush1.msra.mxu0 0.0
  %1342 = vmatprep.mubr.f32.mxu0 0.0
  %1343 = vmatmul.mubr.f32.gmra.mrb[0].mxu0 %v1256
  %v1344 = vpop.f32.mrb[0].mxu0
  %v1345 = vadd.f32 %v1276, %v1344
  %v1346 = vpop.f32.mrb[0].mxu0
  %1347 = vmatprep.mubr.f32.mxu0 0.0
  %1348 = vmatmul.mubr.f32.gmra.mrb[0].mxu0 %v1257
  %v1349 = vpop.f32.mrb[0].mxu0
  %v1350 = vadd.f32 %v1276, %v1349
  %v1351 = vpop.f32.mrb[0].mxu0
  %1352 = vdwg.mxu0
  %v1353 = vadd.f32 %v1117, %v1345
  %v1354 = vadd.f32 %v1118, %v1350
  %1355 = vst.msk [vmem:[%s4] sm:$0xff] %vm28, %v1353
  %1356 = vst.msk [vmem:[%s4 + $0x8] sm:$0xff] %vm28, %v1354
  // Predicated region
  $region18: #{block_forward.1} parent=0 // pred_check
    _
  $region19: #{block_forward.1} parent=0 // pred_check_branch
    %1358 = sbr.rel (0) target = $region21
  $region20: #{block_forward.1} parent=0 // pred_region
    _
  $region21: #{block_forward.1} parent=0 // pred_fallthru
    _
  // Predicated region
  $region22: #{block_forward.1} parent=0 // pred_check
    _
  $region23: #{block_forward.1} parent=0 // pred_check_branch
    %1360 = sbr.rel (0) target = $region25
  $region24: #{block_forward.1} parent=0 // pred_region
    _
  $region25: #{block_forward.1} parent=0 // pred_fallthru
    _

</llo_original>
